<compile_context>
chip_gen: v6e
topology: v6e:2x2x1
jax: 0.10.0
libtpu: 0.0.40
codegen_flags: <defaults>
</compile_context>

<pallas_src>
import jax
import jax.numpy as jnp
from jax import lax
from jax.experimental import pallas as pl
from jax.experimental.pallas import tpu as pltpu

LANE = 128   # vreg lane width
SUB = 8      # vreg sublane count
CHUNK = 8    # GRU timesteps per grid iteration (sublane-dense output block)


def _round_up(x, m):
    return ((x + m - 1) // m) * m


def _gru_chunk_kernel(tok_ref,       # SMEM (Tp,) scalar-prefetched token ids
                      gi_tab_ref,    # (Vp, 3*Hp) f32 precomputed x-projection table (resident)
                      w_hh_ref,      # (Hp, 3*Hp) bf16 recurrent weights (resident)
                      b_hh_ref,      # (1, 3*Hp) f32 bias (only n-gate slot non-zero) (resident)
                      h0_ref,        # (1, Hp) f32 initial hidden (used only at chunk 0)
                      out_ref,       # (CHUNK, Hp) f32 this chunk's per-step GRU outputs
                      h_ref):        # VMEM scratch (1, Hp): recurrent hidden across chunks
    Hp = h0_ref.shape[-1]
    chunk = out_ref.shape[0]
    c = pl.program_id(0)

    @pl.when(c == 0)
    def _():
        h_ref[...] = h0_ref[...]

    w_hh = w_hh_ref[...]          # stays in vregs/VMEM for the whole chunk
    b_hh = b_hh_ref[...]
    h = h_ref[...]                # (1, Hp) f32; lives in vregs inside the chunk

    # Short static unroll: all output stores & gate slices are static/lane-aligned.
    for i in range(chunk):
        tok = tok_ref[c * chunk + i]
        # Precomputed gi = x @ W_ih^T + b_ih (+ b_hh for r/z): one dynamic
        # sublane row gather from the VMEM-resident table, no MXU work for x.
        gi = gi_tab_ref[pl.ds(tok, 1), :]                       # (1, 3*Hp) f32
        gh = jnp.dot(h.astype(w_hh.dtype), w_hh,
                     preferred_element_type=jnp.float32) + b_hh  # (1, 3*Hp) f32

        r = jax.nn.sigmoid(gi[:, 0 * Hp:1 * Hp] + gh[:, 0 * Hp:1 * Hp])
        z = jax.nn.sigmoid(gi[:, 1 * Hp:2 * Hp] + gh[:, 1 * Hp:2 * Hp])
        n = jnp.tanh(gi[:, 2 * Hp:3 * Hp] + r * gh[:, 2 * Hp:3 * Hp])
        h = (1.0 - z) * n + z * h

        out_ref[pl.ds(i, 1), :] = h      # static sublane row store

    h_ref[...] = h                        # persist recurrent state across chunks


def init_params(key, input_size, hidden_size):
    """PyTorch-shaped parameters (nn.Embedding + nn.GRU, gate order [r|z|n])."""
    H = hidden_size
    k = 1.0 / jnp.sqrt(H)
    k_emb, k_wih, k_whh, k_bih, k_bhh = jax.random.split(key, 5)
    return {
        "embedding": jax.random.normal(k_emb, (input_size, H), dtype=jnp.float32),
        "w_ih": jax.random.uniform(k_wih, (3 * H, H), minval=-k, maxval=k, dtype=jnp.float32),
        "w_hh": jax.random.uniform(k_whh, (3 * H, H), minval=-k, maxval=k, dtype=jnp.float32),
        "b_ih": jax.random.uniform(k_bih, (3 * H,), minval=-k, maxval=k, dtype=jnp.float32),
        "b_hh": jax.random.uniform(k_bhh, (3 * H,), minval=-k, maxval=k, dtype=jnp.float32),
    }


def pack_params(params, weight_dtype=jnp.bfloat16):
    """Pad/fuse PyTorch-shaped params into the lane-aligned kernel layout.

    gi_table[v] = emb[v] @ W_ih^T + b_ih, with b_hh_r / b_hh_z folded in (their
    gi+gh sum is linear).  b_hh_n stays separate (needed inside r * gh_n).
    """
    emb = params["embedding"]                               # (V, H)
    w_ih, w_hh = params["w_ih"], params["w_hh"]             # (3H, H)
    b_ih, b_hh = params["b_ih"], params["b_hh"]             # (3H,)
    V, H = emb.shape
    Hp = _round_up(H, LANE)
    Vp = _round_up(V, SUB)

    # Precomputed input projection (exact, f32), gate order [r|z|n].
    gi = emb @ w_ih.T + b_ih                                # (V, 3H)
    gi = gi.at[:, 0:2 * H].add(b_hh[0:2 * H])               # fold b_hh into r, z

    gi_tab = jnp.zeros((Vp, 3 * Hp), jnp.float32)
    w_pack = jnp.zeros((Hp, 3 * Hp), jnp.float32)
    w_hh_t = w_hh.T                                         # (H, 3H)
    for g in range(3):
        gi_tab = gi_tab.at[:V, g * Hp:g * Hp + H].set(gi[:, g * H:(g + 1) * H])
        w_pack = w_pack.at[:H, g * Hp:g * Hp + H].set(w_hh_t[:, g * H:(g + 1) * H])

    b_vec = jnp.zeros((1, 3 * Hp), jnp.float32)
    b_vec = b_vec.at[0, 2 * Hp:2 * Hp + H].set(b_hh[2 * H:3 * H])   # n-gate b_hh only

    return {
        "gi_table": gi_tab,
        "w_hh": w_pack.astype(weight_dtype),   # bf16: MXU-native on v5e/v6e/v7x
        "b_hh": b_vec,
        "H": H, "Hp": Hp, "V": V,
    }


def encoder_rnn_encode(tokens, hidden, packed):
    """Run the encoder over a whole token sequence in ONE pallas_call.

    tokens: (T,) int32; hidden: (1, 1, H) f32.
    Returns (outputs (T, 1, H), final hidden (1, 1, H)) -- identical to calling
    the PyTorch EncoderRNN.forward once per token with the hidden threaded.
    """
    H, Hp = packed["H"], packed["Hp"]
    T = int(tokens.shape[0])
    n_chunks = pl.cdiv(T, CHUNK)
    Tp = n_chunks * CHUNK

    toks = jnp.zeros((Tp,), jnp.int32).at[:T].set(tokens.reshape(T).astype(jnp.int32))
    h0 = jnp.zeros((1, Hp), jnp.float32).at[:, :H].set(
        hidden.reshape(1, H).astype(jnp.float32))

    grid_spec = pltpu.PrefetchScalarGridSpec(
        num_scalar_prefetch=1,              # token ids -> SMEM
        grid=(n_chunks,),                   # CHUNK GRU steps per grid iteration
        in_specs=[
            # Constant block index -> fetched once, VMEM-resident across steps.
            pl.BlockSpec((packed["gi_table"].shape[0], 3 * Hp), lambda c, tok: (0, 0)),
            pl.BlockSpec((Hp, 3 * Hp), lambda c, tok: (0, 0)),
            pl.BlockSpec((1, 3 * Hp), lambda c, tok: (0, 0)),
            pl.BlockSpec((1, Hp), lambda c, tok: (0, 0)),
        ],
        out_specs=pl.BlockSpec((CHUNK, Hp), lambda c, tok: (c, 0)),
        scratch_shapes=[pltpu.VMEM((1, Hp), jnp.float32)],   # recurrent hidden
    )

    outs = pl.pallas_call(
        _gru_chunk_kernel,
        out_shape=jax.ShapeDtypeStruct((Tp, Hp), jnp.float32),
        grid_spec=grid_spec,
        compiler_params=pltpu.CompilerParams(
            # The time recurrence is inherently sequential; a batch of
            # independent sequences would get a leading "parallel" axis.
            dimension_semantics=("arbitrary",)),
    )(toks, packed["gi_table"], packed["w_hh"], packed["b_hh"], h0)

    outputs = outs[:T, :H].reshape(T, 1, H)
    hidden_out = outs[T - 1, :H].reshape(1, 1, H)
    return outputs, hidden_out


def encoder_rnn_forward(token, hidden, packed):
    """Single-step forward matching EncoderRNN.forward(input, hidden)."""
    tokens = jnp.reshape(token, (1,)).astype(jnp.int32)
    outputs, hidden_out = encoder_rnn_encode(tokens, hidden, packed)
    return outputs.reshape(1, 1, -1), hidden_out


# ---------------------------- pure-JAX reference -----------------------------

def _gru_cell_ref(x, h, p):
    H = h.shape[-1]
    gi = x @ p["w_ih"].T + p["b_ih"]
    gh = h @ p["w_hh"].T + p["b_hh"]
    r = jax.nn.sigmoid(gi[:, :H] + gh[:, :H])
    z = jax.nn.sigmoid(gi[:, H:2 * H] + gh[:, H:2 * H])
    n = jnp.tanh(gi[:, 2 * H:] + r * gh[:, 2 * H:])
    return (1.0 - z) * n + z * h


def _reference_encode(tokens, hidden, p):
    H = p["embedding"].shape[1]
    h = hidden.reshape(1, H)
    outs = []
    for t in range(tokens.shape[0]):
        x = p["embedding"][tokens[t]].reshape(1, H)
        h = _gru_cell_ref(x, h, p)
        outs.append(h)
    return jnp.stack(outs).reshape(-1, 1, H), h.reshape(1, 1, H)


if __name__ == "__main__":
    input_size = 50      # vocabulary size
    hidden_size = 32     # GRU hidden size
    seq_len = 8          # tokens encoded inside one kernel

    key = jax.random.PRNGKey(0)
    k_params, k_tok = jax.random.split(key)
    params = init_params(k_params, input_size, hidden_size)
    packed = pack_params(params)           # bf16 recurrent weights

    tokens = jax.random.randint(k_tok, (seq_len,), 0, input_size, dtype=jnp.int32)
    hidden0 = jnp.zeros((1, 1, hidden_size), dtype=jnp.float32)   # initHidden()

    # Whole sequence in one kernel (CHUNK timesteps per grid iteration).
    outputs, hidden_out = encoder_rnn_encode(tokens, hidden0, packed)
    jax.block_until_ready((outputs, hidden_out))

    ref_outputs, ref_hidden = _reference_encode(tokens, hidden0, params)
    assert outputs.shape == (seq_len, 1, hidden_size)
    assert hidden_out.shape == (1, 1, hidden_size)
    # bf16 recurrent weights -> expect ~1e-3 agreement with the f32 reference.
    assert jnp.allclose(outputs, ref_outputs, atol=2e-2, rtol=2e-2), \
        float(jnp.max(jnp.abs(outputs - ref_outputs)))
    assert jnp.allclose(hidden_out, ref_hidden, atol=2e-2, rtol=2e-2)

    # Single-step API matching the PyTorch module's forward exactly.
    out1, hid1 = encoder_rnn_forward(tokens[0], hidden0, packed)
    jax.block_until_ready((out1, hid1))
    ref_o1, ref_h1 = _reference_encode(tokens[:1], hidden0, params)
    assert out1.shape == (1, 1, hidden_size) and hid1.shape == (1, 1, hidden_size)
    assert jnp.allclose(out1, ref_o1.reshape(1, 1, hidden_size), atol=2e-2, rtol=2e-2)
    assert jnp.allclose(hid1, ref_h1, atol=2e-2, rtol=2e-2)

    print("KERNEL_OK")
</pallas_src>

<mosaic_0001>
module attributes {stable_mosaic.version = 11 : i64} {
  func.func @_gru_chunk_kernel(%arg0: i32, %arg1: memref<8xi32, #tpu.memory_space<smem>>, %arg2: memref<56x384xf32, #tpu.memory_space<vmem>>, %arg3: memref<128x384xbf16, #tpu.memory_space<vmem>>, %arg4: memref<1x384xf32, #tpu.memory_space<vmem>>, %arg5: memref<1x128xf32, #tpu.memory_space<vmem>>, %arg6: memref<8x128xf32, #tpu.memory_space<vmem>>, %arg7: memref<1x128xf32, #tpu.memory_space<vmem>>) attributes {dimension_semantics = [#tpu.dimension_semantics<arbitrary>], iteration_bounds = array<i64: 1>, scalar_prefetch = 1 : i64, scratch_operands = 1 : i64, tpu.core_type = #tpu.core_type<tc>, window_params = [{pipeline_mode = #tpu.pipeline_mode<synchronous>, transform_indices = @transform_0, window_bounds = array<i64: 56, 384>}, {pipeline_mode = #tpu.pipeline_mode<synchronous>, transform_indices = @transform_1, window_bounds = array<i64: 128, 384>}, {pipeline_mode = #tpu.pipeline_mode<synchronous>, transform_indices = @transform_2, window_bounds = array<i64: 1, 384>}, {pipeline_mode = #tpu.pipeline_mode<synchronous>, transform_indices = @transform_3, window_bounds = array<i64: 1, 128>}, {transform_indices = @transform_4, window_bounds = array<i64: 8, 128>}]} {
    %c0_i32 = arith.constant 0 : i32
    %0 = arith.cmpi eq, %arg0, %c0_i32 : i32
    %1 = arith.extui %0 : i1 to i32
    %c0_i32_0 = arith.constant 0 : i32
    %2 = arith.cmpi ne, %1, %c0_i32_0 : i32
    scf.if %2 {
      %c0_64 = arith.constant 0 : index
      %c0_65 = arith.constant 0 : index
      %295 = vector.load %arg5[%c0_64, %c0_65] : memref<1x128xf32, #tpu.memory_space<vmem>>, vector<1x128xf32>
      %c0_66 = arith.constant 0 : index
      %c0_67 = arith.constant 0 : index
      %296 = vector.load %arg7[%c0_66, %c0_67] : memref<1x128xf32, #tpu.memory_space<vmem>>, vector<1x128xf32>
      tpu.vector_store %arg7[%c0_66, %c0_67], %295 {strides = array<i32>} : memref<1x128xf32, #tpu.memory_space<vmem>>, vector<1x128xf32>,
    } else {
    }
    %c0 = arith.constant 0 : index
    %c0_1 = arith.constant 0 : index
    %3 = vector.load %arg3[%c0, %c0_1] : memref<128x384xbf16, #tpu.memory_space<vmem>>, vector<128x384xbf16>
    %c0_2 = arith.constant 0 : index
    %c0_3 = arith.constant 0 : index
    %4 = vector.load %arg4[%c0_2, %c0_3] : memref<1x384xf32, #tpu.memory_space<vmem>>, vector<1x384xf32>
    %c0_4 = arith.constant 0 : index
    %c0_5 = arith.constant 0 : index
    %5 = vector.load %arg7[%c0_4, %c0_5] : memref<1x128xf32, #tpu.memory_space<vmem>>, vector<1x128xf32>
    %c8_i32 = arith.constant 8 : i32
    %6 = arith.muli %arg0, %c8_i32 : i32
    %c0_i32_6 = arith.constant 0 : i32
    %7 = arith.addi %6, %c0_i32_6 : i32
    %8 = arith.index_cast %7 : i32 to index
    %9 = memref.load %arg1[%8] : memref<8xi32, #tpu.memory_space<smem>>
    %10 = arith.index_cast %9 : i32 to index
    %c0_7 = arith.constant 0 : index
    %11 = vector.load %arg2[%10, %c0_7] : memref<56x384xf32, #tpu.memory_space<vmem>>, vector<1x384xf32>
    %12 = arith.truncf %5 : vector<1x128xf32> to vector<1x128xbf16>
    %cst = arith.constant dense<0.000000e+00> : vector<1x384xf32>
    %13 = tpu.matmul %12, %3, %cst {dimension_numbers = #tpu.dot_dimension_numbers<[1], [0], [0], [1], [0, 0, 1, 1], [], []>} : vector<1x128xbf16>, vector<128x384xbf16>, vector<1x384xf32> -> vector<1x384xf32>
    %14 = arith.addf %13, %4 : vector<1x384xf32>
    %15 = vector.extract_strided_slice %11 {offsets = [0, 0], sizes = [1, 128], strides = [1, 1]} : vector<1x384xf32> to vector<1x128xf32>
    %16 = vector.extract_strided_slice %14 {offsets = [0, 0], sizes = [1, 128], strides = [1, 1]} : vector<1x384xf32> to vector<1x128xf32>
    %17 = arith.addf %15, %16 : vector<1x128xf32>
    %18 = arith.negf %17 : vector<1x128xf32>
    %19 = math.exp %18 : vector<1x128xf32>
    %cst_8 = arith.constant 1.000000e+00 : f32
    %20 = vector.broadcast %cst_8 : f32 to vector<1x128xf32>
    %21 = arith.addf %20, %19 : vector<1x128xf32>
    %22 = arith.divf %20, %21 : vector<1x128xf32>
    %23 = vector.extract_strided_slice %11 {offsets = [0, 128], sizes = [1, 128], strides = [1, 1]} : vector<1x384xf32> to vector<1x128xf32>
    %24 = vector.extract_strided_slice %14 {offsets = [0, 128], sizes = [1, 128], strides = [1, 1]} : vector<1x384xf32> to vector<1x128xf32>
    %25 = arith.addf %23, %24 : vector<1x128xf32>
    %26 = arith.negf %25 : vector<1x128xf32>
    %27 = math.exp %26 : vector<1x128xf32>
    %cst_9 = arith.constant 1.000000e+00 : f32
    %28 = vector.broadcast %cst_9 : f32 to vector<1x128xf32>
    %29 = arith.addf %28, %27 : vector<1x128xf32>
    %30 = arith.divf %28, %29 : vector<1x128xf32>
    %31 = vector.extract_strided_slice %11 {offsets = [0, 256], sizes = [1, 128], strides = [1, 1]} : vector<1x384xf32> to vector<1x128xf32>
    %32 = vector.extract_strided_slice %14 {offsets = [0, 256], sizes = [1, 128], strides = [1, 1]} : vector<1x384xf32> to vector<1x128xf32>
    %33 = arith.mulf %22, %32 : vector<1x128xf32>
    %34 = arith.addf %31, %33 : vector<1x128xf32>
    %35 = math.tanh %34 : vector<1x128xf32>
    %cst_10 = arith.constant 1.000000e+00 : f32
    %36 = vector.broadcast %cst_10 : f32 to vector<1x128xf32>
    %37 = arith.subf %36, %30 : vector<1x128xf32>
    %38 = arith.mulf %37, %35 : vector<1x128xf32>
    %39 = arith.mulf %30, %5 : vector<1x128xf32>
    %40 = arith.addf %38, %39 : vector<1x128xf32>
    %c0_11 = arith.constant 0 : index
    %c0_12 = arith.constant 0 : index
    %41 = vector.load %arg6[%c0_11, %c0_12] : memref<8x128xf32, #tpu.memory_space<vmem>>, vector<1x128xf32>
    tpu.vector_store %arg6[%c0_11, %c0_12], %40 {strides = array<i32>} : memref<8x128xf32, #tpu.memory_space<vmem>>, vector<1x128xf32>,
    %c8_i32_13 = arith.constant 8 : i32
    %42 = arith.muli %arg0, %c8_i32_13 : i32
    %c1_i32 = arith.constant 1 : i32
    %43 = arith.addi %42, %c1_i32 : i32
    %44 = arith.index_cast %43 : i32 to index
    %45 = memref.load %arg1[%44] : memref<8xi32, #tpu.memory_space<smem>>
    %46 = arith.index_cast %45 : i32 to index
    %c0_14 = arith.constant 0 : index
    %47 = vector.load %arg2[%46, %c0_14] : memref<56x384xf32, #tpu.memory_space<vmem>>, vector<1x384xf32>
    %48 = arith.truncf %40 : vector<1x128xf32> to vector<1x128xbf16>
    %cst_15 = arith.constant dense<0.000000e+00> : vector<1x384xf32>
    %49 = tpu.matmul %48, %3, %cst_15 {dimension_numbers = #tpu.dot_dimension_numbers<[1], [0], [0], [1], [0, 0, 1, 1], [], []>} : vector<1x128xbf16>, vector<128x384xbf16>, vector<1x384xf32> -> vector<1x384xf32>
    %50 = arith.addf %49, %4 : vector<1x384xf32>
    %51 = vector.extract_strided_slice %47 {offsets = [0, 0], sizes = [1, 128], strides = [1, 1]} : vector<1x384xf32> to vector<1x128xf32>
    %52 = vector.extract_strided_slice %50 {offsets = [0, 0], sizes = [1, 128], strides = [1, 1]} : vector<1x384xf32> to vector<1x128xf32>
    %53 = arith.addf %51, %52 : vector<1x128xf32>
    %54 = arith.negf %53 : vector<1x128xf32>
    %55 = math.exp %54 : vector<1x128xf32>
    %cst_16 = arith.constant 1.000000e+00 : f32
    %56 = vector.broadcast %cst_16 : f32 to vector<1x128xf32>
    %57 = arith.addf %56, %55 : vector<1x128xf32>
    %58 = arith.divf %56, %57 : vector<1x128xf32>
    %59 = vector.extract_strided_slice %47 {offsets = [0, 128], sizes = [1, 128], strides = [1, 1]} : vector<1x384xf32> to vector<1x128xf32>
    %60 = vector.extract_strided_slice %50 {offsets = [0, 128], sizes = [1, 128], strides = [1, 1]} : vector<1x384xf32> to vector<1x128xf32>
    %61 = arith.addf %59, %60 : vector<1x128xf32>
    %62 = arith.negf %61 : vector<1x128xf32>
    %63 = math.exp %62 : vector<1x128xf32>
    %cst_17 = arith.constant 1.000000e+00 : f32
    %64 = vector.broadcast %cst_17 : f32 to vector<1x128xf32>
    %65 = arith.addf %64, %63 : vector<1x128xf32>
    %66 = arith.divf %64, %65 : vector<1x128xf32>
    %67 = vector.extract_strided_slice %47 {offsets = [0, 256], sizes = [1, 128], strides = [1, 1]} : vector<1x384xf32> to vector<1x128xf32>
    %68 = vector.extract_strided_slice %50 {offsets = [0, 256], sizes = [1, 128], strides = [1, 1]} : vector<1x384xf32> to vector<1x128xf32>
    %69 = arith.mulf %58, %68 : vector<1x128xf32>
    %70 = arith.addf %67, %69 : vector<1x128xf32>
    %71 = math.tanh %70 : vector<1x128xf32>
    %cst_18 = arith.constant 1.000000e+00 : f32
    %72 = vector.broadcast %cst_18 : f32 to vector<1x128xf32>
    %73 = arith.subf %72, %66 : vector<1x128xf32>
    %74 = arith.mulf %73, %71 : vector<1x128xf32>
    %75 = arith.mulf %66, %40 : vector<1x128xf32>
    %76 = arith.addf %74, %75 : vector<1x128xf32>
    %c1 = arith.constant 1 : index
    %c0_19 = arith.constant 0 : index
    %77 = vector.load %arg6[%c1, %c0_19] : memref<8x128xf32, #tpu.memory_space<vmem>>, vector<1x128xf32>
    tpu.vector_store %arg6[%c1, %c0_19], %76 {strides = array<i32>} : memref<8x128xf32, #tpu.memory_space<vmem>>, vector<1x128xf32>,
    %c8_i32_20 = arith.constant 8 : i32
    %78 = arith.muli %arg0, %c8_i32_20 : i32
    %c2_i32 = arith.constant 2 : i32
    %79 = arith.addi %78, %c2_i32 : i32
    %80 = arith.index_cast %79 : i32 to index
    %81 = memref.load %arg1[%80] : memref<8xi32, #tpu.memory_space<smem>>
    %82 = arith.index_cast %81 : i32 to index
    %c0_21 = arith.constant 0 : index
    %83 = vector.load %arg2[%82, %c0_21] : memref<56x384xf32, #tpu.memory_space<vmem>>, vector<1x384xf32>
    %84 = arith.truncf %76 : vector<1x128xf32> to vector<1x128xbf16>
    %cst_22 = arith.constant dense<0.000000e+00> : vector<1x384xf32>
    %85 = tpu.matmul %84, %3, %cst_22 {dimension_numbers = #tpu.dot_dimension_numbers<[1], [0], [0], [1], [0, 0, 1, 1], [], []>} : vector<1x128xbf16>, vector<128x384xbf16>, vector<1x384xf32> -> vector<1x384xf32>
    %86 = arith.addf %85, %4 : vector<1x384xf32>
    %87 = vector.extract_strided_slice %83 {offsets = [0, 0], sizes = [1, 128], strides = [1, 1]} : vector<1x384xf32> to vector<1x128xf32>
    %88 = vector.extract_strided_slice %86 {offsets = [0, 0], sizes = [1, 128], strides = [1, 1]} : vector<1x384xf32> to vector<1x128xf32>
    %89 = arith.addf %87, %88 : vector<1x128xf32>
    %90 = arith.negf %89 : vector<1x128xf32>
    %91 = math.exp %90 : vector<1x128xf32>
    %cst_23 = arith.constant 1.000000e+00 : f32
    %92 = vector.broadcast %cst_23 : f32 to vector<1x128xf32>
    %93 = arith.addf %92, %91 : vector<1x128xf32>
    %94 = arith.divf %92, %93 : vector<1x128xf32>
    %95 = vector.extract_strided_slice %83 {offsets = [0, 128], sizes = [1, 128], strides = [1, 1]} : vector<1x384xf32> to vector<1x128xf32>
    %96 = vector.extract_strided_slice %86 {offsets = [0, 128], sizes = [1, 128], strides = [1, 1]} : vector<1x384xf32> to vector<1x128xf32>
    %97 = arith.addf %95, %96 : vector<1x128xf32>
    %98 = arith.negf %97 : vector<1x128xf32>
    %99 = math.exp %98 : vector<1x128xf32>
    %cst_24 = arith.constant 1.000000e+00 : f32
    %100 = vector.broadcast %cst_24 : f32 to vector<1x128xf32>
    %101 = arith.addf %100, %99 : vector<1x128xf32>
    %102 = arith.divf %100, %101 : vector<1x128xf32>
    %103 = vector.extract_strided_slice %83 {offsets = [0, 256], sizes = [1, 128], strides = [1, 1]} : vector<1x384xf32> to vector<1x128xf32>
    %104 = vector.extract_strided_slice %86 {offsets = [0, 256], sizes = [1, 128], strides = [1, 1]} : vector<1x384xf32> to vector<1x128xf32>
    %105 = arith.mulf %94, %104 : vector<1x128xf32>
    %106 = arith.addf %103, %105 : vector<1x128xf32>
    %107 = math.tanh %106 : vector<1x128xf32>
    %cst_25 = arith.constant 1.000000e+00 : f32
    %108 = vector.broadcast %cst_25 : f32 to vector<1x128xf32>
    %109 = arith.subf %108, %102 : vector<1x128xf32>
    %110 = arith.mulf %109, %107 : vector<1x128xf32>
    %111 = arith.mulf %102, %76 : vector<1x128xf32>
    %112 = arith.addf %110, %111 : vector<1x128xf32>
    %c2 = arith.constant 2 : index
    %c0_26 = arith.constant 0 : index
    %113 = vector.load %arg6[%c2, %c0_26] : memref<8x128xf32, #tpu.memory_space<vmem>>, vector<1x128xf32>
    tpu.vector_store %arg6[%c2, %c0_26], %112 {strides = array<i32>} : memref<8x128xf32, #tpu.memory_space<vmem>>, vector<1x128xf32>,
    %c8_i32_27 = arith.constant 8 : i32
    %114 = arith.muli %arg0, %c8_i32_27 : i32
    %c3_i32 = arith.constant 3 : i32
    %115 = arith.addi %114, %c3_i32 : i32
    %116 = arith.index_cast %115 : i32 to index
    %117 = memref.load %arg1[%116] : memref<8xi32, #tpu.memory_space<smem>>
    %118 = arith.index_cast %117 : i32 to index
    %c0_28 = arith.constant 0 : index
    %119 = vector.load %arg2[%118, %c0_28] : memref<56x384xf32, #tpu.memory_space<vmem>>, vector<1x384xf32>
    %120 = arith.truncf %112 : vector<1x128xf32> to vector<1x128xbf16>
    %cst_29 = arith.constant dense<0.000000e+00> : vector<1x384xf32>
    %121 = tpu.matmul %120, %3, %cst_29 {dimension_numbers = #tpu.dot_dimension_numbers<[1], [0], [0], [1], [0, 0, 1, 1], [], []>} : vector<1x128xbf16>, vector<128x384xbf16>, vector<1x384xf32> -> vector<1x384xf32>
    %122 = arith.addf %121, %4 : vector<1x384xf32>
    %123 = vector.extract_strided_slice %119 {offsets = [0, 0], sizes = [1, 128], strides = [1, 1]} : vector<1x384xf32> to vector<1x128xf32>
    %124 = vector.extract_strided_slice %122 {offsets = [0, 0], sizes = [1, 128], strides = [1, 1]} : vector<1x384xf32> to vector<1x128xf32>
    %125 = arith.addf %123, %124 : vector<1x128xf32>
    %126 = arith.negf %125 : vector<1x128xf32>
    %127 = math.exp %126 : vector<1x128xf32>
    %cst_30 = arith.constant 1.000000e+00 : f32
    %128 = vector.broadcast %cst_30 : f32 to vector<1x128xf32>
    %129 = arith.addf %128, %127 : vector<1x128xf32>
    %130 = arith.divf %128, %129 : vector<1x128xf32>
    %131 = vector.extract_strided_slice %119 {offsets = [0, 128], sizes = [1, 128], strides = [1, 1]} : vector<1x384xf32> to vector<1x128xf32>
    %132 = vector.extract_strided_slice %122 {offsets = [0, 128], sizes = [1, 128], strides = [1, 1]} : vector<1x384xf32> to vector<1x128xf32>
    %133 = arith.addf %131, %132 : vector<1x128xf32>
    %134 = arith.negf %133 : vector<1x128xf32>
    %135 = math.exp %134 : vector<1x128xf32>
    %cst_31 = arith.constant 1.000000e+00 : f32
    %136 = vector.broadcast %cst_31 : f32 to vector<1x128xf32>
    %137 = arith.addf %136, %135 : vector<1x128xf32>
    %138 = arith.divf %136, %137 : vector<1x128xf32>
    %139 = vector.extract_strided_slice %119 {offsets = [0, 256], sizes = [1, 128], strides = [1, 1]} : vector<1x384xf32> to vector<1x128xf32>
    %140 = vector.extract_strided_slice %122 {offsets = [0, 256], sizes = [1, 128], strides = [1, 1]} : vector<1x384xf32> to vector<1x128xf32>
    %141 = arith.mulf %130, %140 : vector<1x128xf32>
    %142 = arith.addf %139, %141 : vector<1x128xf32>
    %143 = math.tanh %142 : vector<1x128xf32>
    %cst_32 = arith.constant 1.000000e+00 : f32
    %144 = vector.broadcast %cst_32 : f32 to vector<1x128xf32>
    %145 = arith.subf %144, %138 : vector<1x128xf32>
    %146 = arith.mulf %145, %143 : vector<1x128xf32>
    %147 = arith.mulf %138, %112 : vector<1x128xf32>
    %148 = arith.addf %146, %147 : vector<1x128xf32>
    %c3 = arith.constant 3 : index
    %c0_33 = arith.constant 0 : index
    %149 = vector.load %arg6[%c3, %c0_33] : memref<8x128xf32, #tpu.memory_space<vmem>>, vector<1x128xf32>
    tpu.vector_store %arg6[%c3, %c0_33], %148 {strides = array<i32>} : memref<8x128xf32, #tpu.memory_space<vmem>>, vector<1x128xf32>,
    %c8_i32_34 = arith.constant 8 : i32
    %150 = arith.muli %arg0, %c8_i32_34 : i32
    %c4_i32 = arith.constant 4 : i32
    %151 = arith.addi %150, %c4_i32 : i32
    %152 = arith.index_cast %151 : i32 to index
    %153 = memref.load %arg1[%152] : memref<8xi32, #tpu.memory_space<smem>>
    %154 = arith.index_cast %153 : i32 to index
    %c0_35 = arith.constant 0 : index
    %155 = vector.load %arg2[%154, %c0_35] : memref<56x384xf32, #tpu.memory_space<vmem>>, vector<1x384xf32>
    %156 = arith.truncf %148 : vector<1x128xf32> to vector<1x128xbf16>
    %cst_36 = arith.constant dense<0.000000e+00> : vector<1x384xf32>
    %157 = tpu.matmul %156, %3, %cst_36 {dimension_numbers = #tpu.dot_dimension_numbers<[1], [0], [0], [1], [0, 0, 1, 1], [], []>} : vector<1x128xbf16>, vector<128x384xbf16>, vector<1x384xf32> -> vector<1x384xf32>
    %158 = arith.addf %157, %4 : vector<1x384xf32>
    %159 = vector.extract_strided_slice %155 {offsets = [0, 0], sizes = [1, 128], strides = [1, 1]} : vector<1x384xf32> to vector<1x128xf32>
    %160 = vector.extract_strided_slice %158 {offsets = [0, 0], sizes = [1, 128], strides = [1, 1]} : vector<1x384xf32> to vector<1x128xf32>
    %161 = arith.addf %159, %160 : vector<1x128xf32>
    %162 = arith.negf %161 : vector<1x128xf32>
    %163 = math.exp %162 : vector<1x128xf32>
    %cst_37 = arith.constant 1.000000e+00 : f32
    %164 = vector.broadcast %cst_37 : f32 to vector<1x128xf32>
    %165 = arith.addf %164, %163 : vector<1x128xf32>
    %166 = arith.divf %164, %165 : vector<1x128xf32>
    %167 = vector.extract_strided_slice %155 {offsets = [0, 128], sizes = [1, 128], strides = [1, 1]} : vector<1x384xf32> to vector<1x128xf32>
    %168 = vector.extract_strided_slice %158 {offsets = [0, 128], sizes = [1, 128], strides = [1, 1]} : vector<1x384xf32> to vector<1x128xf32>
    %169 = arith.addf %167, %168 : vector<1x128xf32>
    %170 = arith.negf %169 : vector<1x128xf32>
    %171 = math.exp %170 : vector<1x128xf32>
    %cst_38 = arith.constant 1.000000e+00 : f32
    %172 = vector.broadcast %cst_38 : f32 to vector<1x128xf32>
    %173 = arith.addf %172, %171 : vector<1x128xf32>
    %174 = arith.divf %172, %173 : vector<1x128xf32>
    %175 = vector.extract_strided_slice %155 {offsets = [0, 256], sizes = [1, 128], strides = [1, 1]} : vector<1x384xf32> to vector<1x128xf32>
    %176 = vector.extract_strided_slice %158 {offsets = [0, 256], sizes = [1, 128], strides = [1, 1]} : vector<1x384xf32> to vector<1x128xf32>
    %177 = arith.mulf %166, %176 : vector<1x128xf32>
    %178 = arith.addf %175, %177 : vector<1x128xf32>
    %179 = math.tanh %178 : vector<1x128xf32>
    %cst_39 = arith.constant 1.000000e+00 : f32
    %180 = vector.broadcast %cst_39 : f32 to vector<1x128xf32>
    %181 = arith.subf %180, %174 : vector<1x128xf32>
    %182 = arith.mulf %181, %179 : vector<1x128xf32>
    %183 = arith.mulf %174, %148 : vector<1x128xf32>
    %184 = arith.addf %182, %183 : vector<1x128xf32>
    %c4 = arith.constant 4 : index
    %c0_40 = arith.constant 0 : index
    %185 = vector.load %arg6[%c4, %c0_40] : memref<8x128xf32, #tpu.memory_space<vmem>>, vector<1x128xf32>
    tpu.vector_store %arg6[%c4, %c0_40], %184 {strides = array<i32>} : memref<8x128xf32, #tpu.memory_space<vmem>>, vector<1x128xf32>,
    %c8_i32_41 = arith.constant 8 : i32
    %186 = arith.muli %arg0, %c8_i32_41 : i32
    %c5_i32 = arith.constant 5 : i32
    %187 = arith.addi %186, %c5_i32 : i32
    %188 = arith.index_cast %187 : i32 to index
    %189 = memref.load %arg1[%188] : memref<8xi32, #tpu.memory_space<smem>>
    %190 = arith.index_cast %189 : i32 to index
    %c0_42 = arith.constant 0 : index
    %191 = vector.load %arg2[%190, %c0_42] : memref<56x384xf32, #tpu.memory_space<vmem>>, vector<1x384xf32>
    %192 = arith.truncf %184 : vector<1x128xf32> to vector<1x128xbf16>
    %cst_43 = arith.constant dense<0.000000e+00> : vector<1x384xf32>
    %193 = tpu.matmul %192, %3, %cst_43 {dimension_numbers = #tpu.dot_dimension_numbers<[1], [0], [0], [1], [0, 0, 1, 1], [], []>} : vector<1x128xbf16>, vector<128x384xbf16>, vector<1x384xf32> -> vector<1x384xf32>
    %194 = arith.addf %193, %4 : vector<1x384xf32>
    %195 = vector.extract_strided_slice %191 {offsets = [0, 0], sizes = [1, 128], strides = [1, 1]} : vector<1x384xf32> to vector<1x128xf32>
    %196 = vector.extract_strided_slice %194 {offsets = [0, 0], sizes = [1, 128], strides = [1, 1]} : vector<1x384xf32> to vector<1x128xf32>
    %197 = arith.addf %195, %196 : vector<1x128xf32>
    %198 = arith.negf %197 : vector<1x128xf32>
    %199 = math.exp %198 : vector<1x128xf32>
    %cst_44 = arith.constant 1.000000e+00 : f32
    %200 = vector.broadcast %cst_44 : f32 to vector<1x128xf32>
    %201 = arith.addf %200, %199 : vector<1x128xf32>
    %202 = arith.divf %200, %201 : vector<1x128xf32>
    %203 = vector.extract_strided_slice %191 {offsets = [0, 128], sizes = [1, 128], strides = [1, 1]} : vector<1x384xf32> to vector<1x128xf32>
    %204 = vector.extract_strided_slice %194 {offsets = [0, 128], sizes = [1, 128], strides = [1, 1]} : vector<1x384xf32> to vector<1x128xf32>
    %205 = arith.addf %203, %204 : vector<1x128xf32>
    %206 = arith.negf %205 : vector<1x128xf32>
    %207 = math.exp %206 : vector<1x128xf32>
    %cst_45 = arith.constant 1.000000e+00 : f32
    %208 = vector.broadcast %cst_45 : f32 to vector<1x128xf32>
    %209 = arith.addf %208, %207 : vector<1x128xf32>
    %210 = arith.divf %208, %209 : vector<1x128xf32>
    %211 = vector.extract_strided_slice %191 {offsets = [0, 256], sizes = [1, 128], strides = [1, 1]} : vector<1x384xf32> to vector<1x128xf32>
    %212 = vector.extract_strided_slice %194 {offsets = [0, 256], sizes = [1, 128], strides = [1, 1]} : vector<1x384xf32> to vector<1x128xf32>
    %213 = arith.mulf %202, %212 : vector<1x128xf32>
    %214 = arith.addf %211, %213 : vector<1x128xf32>
    %215 = math.tanh %214 : vector<1x128xf32>
    %cst_46 = arith.constant 1.000000e+00 : f32
    %216 = vector.broadcast %cst_46 : f32 to vector<1x128xf32>
    %217 = arith.subf %216, %210 : vector<1x128xf32>
    %218 = arith.mulf %217, %215 : vector<1x128xf32>
    %219 = arith.mulf %210, %184 : vector<1x128xf32>
    %220 = arith.addf %218, %219 : vector<1x128xf32>
    %c5 = arith.constant 5 : index
    %c0_47 = arith.constant 0 : index
    %221 = vector.load %arg6[%c5, %c0_47] : memref<8x128xf32, #tpu.memory_space<vmem>>, vector<1x128xf32>
    tpu.vector_store %arg6[%c5, %c0_47], %220 {strides = array<i32>} : memref<8x128xf32, #tpu.memory_space<vmem>>, vector<1x128xf32>,
    %c8_i32_48 = arith.constant 8 : i32
    %222 = arith.muli %arg0, %c8_i32_48 : i32
    %c6_i32 = arith.constant 6 : i32
    %223 = arith.addi %222, %c6_i32 : i32
    %224 = arith.index_cast %223 : i32 to index
    %225 = memref.load %arg1[%224] : memref<8xi32, #tpu.memory_space<smem>>
    %226 = arith.index_cast %225 : i32 to index
    %c0_49 = arith.constant 0 : index
    %227 = vector.load %arg2[%226, %c0_49] : memref<56x384xf32, #tpu.memory_space<vmem>>, vector<1x384xf32>
    %228 = arith.truncf %220 : vector<1x128xf32> to vector<1x128xbf16>
    %cst_50 = arith.constant dense<0.000000e+00> : vector<1x384xf32>
    %229 = tpu.matmul %228, %3, %cst_50 {dimension_numbers = #tpu.dot_dimension_numbers<[1], [0], [0], [1], [0, 0, 1, 1], [], []>} : vector<1x128xbf16>, vector<128x384xbf16>, vector<1x384xf32> -> vector<1x384xf32>
    %230 = arith.addf %229, %4 : vector<1x384xf32>
    %231 = vector.extract_strided_slice %227 {offsets = [0, 0], sizes = [1, 128], strides = [1, 1]} : vector<1x384xf32> to vector<1x128xf32>
    %232 = vector.extract_strided_slice %230 {offsets = [0, 0], sizes = [1, 128], strides = [1, 1]} : vector<1x384xf32> to vector<1x128xf32>
    %233 = arith.addf %231, %232 : vector<1x128xf32>
    %234 = arith.negf %233 : vector<1x128xf32>
    %235 = math.exp %234 : vector<1x128xf32>
    %cst_51 = arith.constant 1.000000e+00 : f32
    %236 = vector.broadcast %cst_51 : f32 to vector<1x128xf32>
    %237 = arith.addf %236, %235 : vector<1x128xf32>
    %238 = arith.divf %236, %237 : vector<1x128xf32>
    %239 = vector.extract_strided_slice %227 {offsets = [0, 128], sizes = [1, 128], strides = [1, 1]} : vector<1x384xf32> to vector<1x128xf32>
    %240 = vector.extract_strided_slice %230 {offsets = [0, 128], sizes = [1, 128], strides = [1, 1]} : vector<1x384xf32> to vector<1x128xf32>
    %241 = arith.addf %239, %240 : vector<1x128xf32>
    %242 = arith.negf %241 : vector<1x128xf32>
    %243 = math.exp %242 : vector<1x128xf32>
    %cst_52 = arith.constant 1.000000e+00 : f32
    %244 = vector.broadcast %cst_52 : f32 to vector<1x128xf32>
    %245 = arith.addf %244, %243 : vector<1x128xf32>
    %246 = arith.divf %244, %245 : vector<1x128xf32>
    %247 = vector.extract_strided_slice %227 {offsets = [0, 256], sizes = [1, 128], strides = [1, 1]} : vector<1x384xf32> to vector<1x128xf32>
    %248 = vector.extract_strided_slice %230 {offsets = [0, 256], sizes = [1, 128], strides = [1, 1]} : vector<1x384xf32> to vector<1x128xf32>
    %249 = arith.mulf %238, %248 : vector<1x128xf32>
    %250 = arith.addf %247, %249 : vector<1x128xf32>
    %251 = math.tanh %250 : vector<1x128xf32>
    %cst_53 = arith.constant 1.000000e+00 : f32
    %252 = vector.broadcast %cst_53 : f32 to vector<1x128xf32>
    %253 = arith.subf %252, %246 : vector<1x128xf32>
    %254 = arith.mulf %253, %251 : vector<1x128xf32>
    %255 = arith.mulf %246, %220 : vector<1x128xf32>
    %256 = arith.addf %254, %255 : vector<1x128xf32>
    %c6 = arith.constant 6 : index
    %c0_54 = arith.constant 0 : index
    %257 = vector.load %arg6[%c6, %c0_54] : memref<8x128xf32, #tpu.memory_space<vmem>>, vector<1x128xf32>
    tpu.vector_store %arg6[%c6, %c0_54], %256 {strides = array<i32>} : memref<8x128xf32, #tpu.memory_space<vmem>>, vector<1x128xf32>,
    %c8_i32_55 = arith.constant 8 : i32
    %258 = arith.muli %arg0, %c8_i32_55 : i32
    %c7_i32 = arith.constant 7 : i32
    %259 = arith.addi %258, %c7_i32 : i32
    %260 = arith.index_cast %259 : i32 to index
    %261 = memref.load %arg1[%260] : memref<8xi32, #tpu.memory_space<smem>>
    %262 = arith.index_cast %261 : i32 to index
    %c0_56 = arith.constant 0 : index
    %263 = vector.load %arg2[%262, %c0_56] : memref<56x384xf32, #tpu.memory_space<vmem>>, vector<1x384xf32>
    %264 = arith.truncf %256 : vector<1x128xf32> to vector<1x128xbf16>
    %cst_57 = arith.constant dense<0.000000e+00> : vector<1x384xf32>
    %265 = tpu.matmul %264, %3, %cst_57 {dimension_numbers = #tpu.dot_dimension_numbers<[1], [0], [0], [1], [0, 0, 1, 1], [], []>} : vector<1x128xbf16>, vector<128x384xbf16>, vector<1x384xf32> -> vector<1x384xf32>
    %266 = arith.addf %265, %4 : vector<1x384xf32>
    %267 = vector.extract_strided_slice %263 {offsets = [0, 0], sizes = [1, 128], strides = [1, 1]} : vector<1x384xf32> to vector<1x128xf32>
    %268 = vector.extract_strided_slice %266 {offsets = [0, 0], sizes = [1, 128], strides = [1, 1]} : vector<1x384xf32> to vector<1x128xf32>
    %269 = arith.addf %267, %268 : vector<1x128xf32>
    %270 = arith.negf %269 : vector<1x128xf32>
    %271 = math.exp %270 : vector<1x128xf32>
    %cst_58 = arith.constant 1.000000e+00 : f32
    %272 = vector.broadcast %cst_58 : f32 to vector<1x128xf32>
    %273 = arith.addf %272, %271 : vector<1x128xf32>
    %274 = arith.divf %272, %273 : vector<1x128xf32>
    %275 = vector.extract_strided_slice %263 {offsets = [0, 128], sizes = [1, 128], strides = [1, 1]} : vector<1x384xf32> to vector<1x128xf32>
    %276 = vector.extract_strided_slice %266 {offsets = [0, 128], sizes = [1, 128], strides = [1, 1]} : vector<1x384xf32> to vector<1x128xf32>
    %277 = arith.addf %275, %276 : vector<1x128xf32>
    %278 = arith.negf %277 : vector<1x128xf32>
    %279 = math.exp %278 : vector<1x128xf32>
    %cst_59 = arith.constant 1.000000e+00 : f32
    %280 = vector.broadcast %cst_59 : f32 to vector<1x128xf32>
    %281 = arith.addf %280, %279 : vector<1x128xf32>
    %282 = arith.divf %280, %281 : vector<1x128xf32>
    %283 = vector.extract_strided_slice %263 {offsets = [0, 256], sizes = [1, 128], strides = [1, 1]} : vector<1x384xf32> to vector<1x128xf32>
    %284 = vector.extract_strided_slice %266 {offsets = [0, 256], sizes = [1, 128], strides = [1, 1]} : vector<1x384xf32> to vector<1x128xf32>
    %285 = arith.mulf %274, %284 : vector<1x128xf32>
    %286 = arith.addf %283, %285 : vector<1x128xf32>
    %287 = math.tanh %286 : vector<1x128xf32>
    %cst_60 = arith.constant 1.000000e+00 : f32
    %288 = vector.broadcast %cst_60 : f32 to vector<1x128xf32>
    %289 = arith.subf %288, %282 : vector<1x128xf32>
    %290 = arith.mulf %289, %287 : vector<1x128xf32>
    %291 = arith.mulf %282, %256 : vector<1x128xf32>
    %292 = arith.addf %290, %291 : vector<1x128xf32>
    %c7 = arith.constant 7 : index
    %c0_61 = arith.constant 0 : index
    %293 = vector.load %arg6[%c7, %c0_61] : memref<8x128xf32, #tpu.memory_space<vmem>>, vector<1x128xf32>
    tpu.vector_store %arg6[%c7, %c0_61], %292 {strides = array<i32>} : memref<8x128xf32, #tpu.memory_space<vmem>>, vector<1x128xf32>,
    %c0_62 = arith.constant 0 : index
    %c0_63 = arith.constant 0 : index
    %294 = vector.load %arg7[%c0_62, %c0_63] : memref<1x128xf32, #tpu.memory_space<vmem>>, vector<1x128xf32>
    tpu.vector_store %arg7[%c0_62, %c0_63], %292 {strides = array<i32>} : memref<1x128xf32, #tpu.memory_space<vmem>>, vector<1x128xf32>,
    return
  }
  func.func @transform_0(%arg0: i32, %arg1: memref<8xi32, #tpu.memory_space<smem>>) -> (i32, i32) {
    %c0_i32 = arith.constant 0 : i32
    %c0_i32_0 = arith.constant 0 : i32
    %c0_i32_1 = arith.constant 0 : i32
    return %c0_i32, %c0_i32_0 : i32, i32
  }
  func.func @transform_1(%arg0: i32, %arg1: memref<8xi32, #tpu.memory_space<smem>>) -> (i32, i32) {
    %c0_i32 = arith.constant 0 : i32
    %c0_i32_0 = arith.constant 0 : i32
    %c0_i32_1 = arith.constant 0 : i32
    return %c0_i32, %c0_i32_0 : i32, i32
  }
  func.func @transform_2(%arg0: i32, %arg1: memref<8xi32, #tpu.memory_space<smem>>) -> (i32, i32) {
    %c0_i32 = arith.constant 0 : i32
    %c0_i32_0 = arith.constant 0 : i32
    %c0_i32_1 = arith.constant 0 : i32
    return %c0_i32, %c0_i32_0 : i32, i32
  }
  func.func @transform_3(%arg0: i32, %arg1: memref<8xi32, #tpu.memory_space<smem>>) -> (i32, i32) {
    %c0_i32 = arith.constant 0 : i32
    %c0_i32_0 = arith.constant 0 : i32
    %c0_i32_1 = arith.constant 0 : i32
    return %c0_i32, %c0_i32_0 : i32, i32
  }
  func.func @transform_4(%arg0: i32, %arg1: memref<8xi32, #tpu.memory_space<smem>>) -> (i32, i32) {
    %c0_i32 = arith.constant 0 : i32
    %c0_i32_0 = arith.constant 0 : i32
    return %arg0, %c0_i32 : i32, i32
  }
}

</mosaic_0001>

<llo_original>
// kernel: tpu_custom_call.1
$region0: #{tpu_custom_call.1}
  #allocation0 [shape = 'u32[]', space=smem, size = 0x4, offset = 0x4, fixed_abs, tag = 'smem constant byte address 0x4 - core index']
  #allocation1 [shape = 'u32[144,128]{1,0:T(1,128)}', space=vmem, size = 0x12000, scoped, tag = 'internal scratch']
  #allocation2 [shape = 'f32[1,128]{1,0:T(1,128)}', space=vmem, size = 0x200, scoped, tag = 'scratch operand']
  #allocation3 [shape = 's32[1]{0}', space=sflag, size = 0x4, scoped, tag = 'scoped memory for tpu_custom_call.1']
  #allocation4 [shape = 'u8[512]{0}', space=smem, size = 0x200, scoped, tag = 'prefetched SMEM operand 0']
  %s0 = inlined_call_operand.hbm [shape: s32[8], index: 0, kind: input, shape index: {}]
  %s1 = inlined_call_operand.hbm [shape: f32[56,384], index: 1, kind: input, shape index: {}]
  %s2 = inlined_call_operand.hbm [shape: bf16[128,384], index: 2, kind: input, shape index: {}]
  %s3 = inlined_call_operand.vmem [shape: f32[1,384], index: 3, kind: input, shape index: {}]
  %s4 = inlined_call_operand.vmem [shape: f32[1,128], index: 4, kind: input, shape index: {}]
  %s5 = inlined_call_operand.hbm [shape: f32[8,128], index: 5, kind: output, shape index: {}]
  %s6 = sld [smem:[#allocation0]]
  $region38: #{tpu_custom_call.1} parent=0
    _
  %s8 = ssub.s32 1, %s6
  %s9 = scalar_select 0, %s8, %s6
  %11 = dma.hbm_to_smem %s0, 16, [#allocation4], [#allocation3]
  %12 = dma.done [#allocation3], 16
  %13 = sfence
  $region1: #{tpu_custom_call.1} parent=0
    #allocation5 [shape = 'u8[86016]{0}', space=vmem, size = 0x15000, scoped, tag = 'input window, operand 1, single buffered']
    #allocation6 [shape = 's32[1]{0}', space=sflag, size = 0x4, scoped, tag = 'scoped memory for tpu_custom_call.1']
    #allocation7 [shape = 's32[1]{0}', space=sflag, size = 0x4, scoped, tag = 'scoped memory for tpu_custom_call.1']
    #allocation8 [shape = 'u8[98304]{0}', space=vmem, size = 0x18000, scoped, tag = 'input window, operand 2, single buffered']
    #allocation9 [shape = 's32[1]{0}', space=sflag, size = 0x4, scoped, tag = 'scoped memory for tpu_custom_call.1']
    #allocation10 [shape = 'u8[4096]{0}', space=vmem, size = 0x1000, scoped, tag = 'output window, operand 0, single buffered']
    %14 = vsyncpa [#allocation6], 0
    %15 = vsyncpa [#allocation9], 0
    %16 = vsyncpa [#allocation7], 0
    // Predicated region
    $region2: #{tpu_custom_call.1} parent=1 // pred_check
      _
    $region3: #{tpu_custom_call.1} parent=1 // pred_check_branch
      %18 = sbr.rel (0) target = $region5
    $region4: #{tpu_custom_call.1} parent=1 // pred_region
      %s20 = ssub.s32 2688, 2688
      %21 = vsyncadd [#allocation6], %s20
      %s22 = sshll.u32 [#allocation5], 4
      %s23 = int_to_ptr.vmem [resolvable:$true] %s22
      %28 = dma.hbm_to_vmem [thread:$0]  %s1, 2688, %s23, [#allocation6], 384, 384, 24
    $region5: #{tpu_custom_call.1} parent=1 // pred_fallthru
      _
    // Predicated region
    $region6: #{tpu_custom_call.1} parent=1 // pred_check
      _
    $region7: #{tpu_custom_call.1} parent=1 // pred_check_branch
      %30 = sbr.rel (0) target = $region9
    $region8: #{tpu_custom_call.1} parent=1 // pred_region
      %s32 = ssub.s32 3072, 3072
      %33 = vsyncadd [#allocation9], %s32
      %s34 = sshll.u32 [#allocation8], 4
      %s35 = int_to_ptr.vmem [resolvable:$true] %s34
      %40 = dma.hbm_to_vmem [thread:$0]  %s2, 3072, %s35, [#allocation9], 192, 192, 12
    $region9: #{tpu_custom_call.1} parent=1 // pred_fallthru
      _
    // Predicated region
    $region10: #{tpu_custom_call.1} parent=1 // pred_check
      _
    $region11: #{tpu_custom_call.1} parent=1 // pred_check_branch
      %42 = sbr.rel (0) target = $region13
    $region12: #{tpu_custom_call.1} parent=1 // pred_region
      _
    $region13: #{tpu_custom_call.1} parent=1 // pred_fallthru
      _
    // Predicated region
    $region14: #{tpu_custom_call.1} parent=1 // pred_check
      _
    $region15: #{tpu_custom_call.1} parent=1 // pred_check_branch
      %44 = sbr.rel (0) target = $region17
    $region16: #{tpu_custom_call.1} parent=1 // pred_region
      _
    $region17: #{tpu_custom_call.1} parent=1 // pred_fallthru
      _
    // Predicated region
    $region18: #{tpu_custom_call.1} parent=1 // pred_check
      _
    $region19: #{tpu_custom_call.1} parent=1 // pred_check_branch
      %46 = sbr.rel (0) target = $region21
    $region20: #{tpu_custom_call.1} parent=1 // pred_region
      %47 = dma.done [#allocation6], 2688
    $region21: #{tpu_custom_call.1} parent=1 // pred_fallthru
      _
    // Predicated region
    $region22: #{tpu_custom_call.1} parent=1 // pred_check
      _
    $region23: #{tpu_custom_call.1} parent=1 // pred_check_branch
      %49 = sbr.rel (0) target = $region25
    $region24: #{tpu_custom_call.1} parent=1 // pred_region
      %50 = dma.done [#allocation9], 3072
    $region25: #{tpu_custom_call.1} parent=1 // pred_fallthru
      _
    %p52 = scmp.eq.s32.totalorder 0, 0
    // Predicated region
    $region26: #{tpu_custom_call.1} parent=1 // pred_check
      %p53 = pneg %p52
    $region27: #{tpu_custom_call.1} parent=1 // pred_check_branch
      %55 = sbr.rel (%p53) target = $region29
    $region28: #{tpu_custom_call.1} parent=1 // pred_region
      %v56 = vld [vmem:[%s4] sm:$0x1]
      %57 = vst [vmem:[#allocation2] sm:$0x1] %v56
    $region29: #{tpu_custom_call.1} parent=1 // pred_fallthru
      _
    %v58 = vld [vmem:[#allocation8] sm:$0xff]
    %v59 = vld [vmem:[#allocation8 + $0x8] sm:$0xf]
    %v60 = vld [vmem:[#allocation8 + $0xc] sm:$0xff]
    %v61 = vld [vmem:[#allocation8 + $0x14] sm:$0xf]
    %v62 = vld [vmem:[#allocation8 + $0x18] sm:$0xff]
    %v63 = vld [vmem:[#allocation8 + $0x20] sm:$0xf]
    %v64 = vld [vmem:[#allocation8 + $0x24] sm:$0xff]
    %v65 = vld [vmem:[#allocation8 + $0x2c] sm:$0xf]
    %v66 = vld [vmem:[#allocation8 + $0x30] sm:$0xff]
    %v67 = vld [vmem:[#allocation8 + $0x38] sm:$0xf]
    %v68 = vld [vmem:[#allocation8 + $0x3c] sm:$0xff]
    %v69 = vld [vmem:[#allocation8 + $0x44] sm:$0xf]
    %v70 = vld [vmem:[#allocation8 + $0x48] sm:$0xff]
    %v71 = vld [vmem:[#allocation8 + $0x50] sm:$0xf]
    %v72 = vld [vmem:[#allocation8 + $0x54] sm:$0xff]
    %v73 = vld [vmem:[#allocation8 + $0x5c] sm:$0xf]
    %v74 = vld [vmem:[#allocation8 + $0x60] sm:$0xff]
    %v75 = vld [vmem:[#allocation8 + $0x68] sm:$0xf]
    %v76 = vld [vmem:[#allocation8 + $0x6c] sm:$0xff]
    %v77 = vld [vmem:[#allocation8 + $0x74] sm:$0xf]
    %v78 = vld [vmem:[#allocation8 + $0x78] sm:$0xff]
    %v79 = vld [vmem:[#allocation8 + $0x80] sm:$0xf]
    %v80 = vld [vmem:[#allocation8 + $0x84] sm:$0xff]
    %v81 = vld [vmem:[#allocation8 + $0x8c] sm:$0xf]
    %v82 = vld [vmem:[#allocation8 + $0x90] sm:$0xff]
    %v83 = vld [vmem:[#allocation8 + $0x98] sm:$0xf]
    %v84 = vld [vmem:[#allocation8 + $0x9c] sm:$0xff]
    %v85 = vld [vmem:[#allocation8 + $0xa4] sm:$0xf]
    %v86 = vld [vmem:[#allocation8 + $0xa8] sm:$0xff]
    %v87 = vld [vmem:[#allocation8 + $0xb0] sm:$0xf]
    %v88 = vld [vmem:[#allocation8 + $0xb4] sm:$0xff]
    %v89 = vld [vmem:[#allocation8 + $0xbc] sm:$0xf]
    %v90 = vld [vmem:[%s3] sm:$0x7]
    %v91 = vld [vmem:[#allocation2] sm:$0x1]
    %s92 = smul.u32 0, 8
    %s93 = sld [smem:[#allocation4 + %s92]]
    %s94 = sshra.s32 %s93, 3
    %s95 = sand.u32 %s93, 7
    %s96 = sshra.s32 %s93, 3
    %s97 = sand.u32 %s93, 7
    %s98 = smul.u32 %s94, 3
    %s99 = smul.u32 %s98, 8
    %s100 = sadd.s32 %s99, %s97
    %s101 = scalar_lea.vmem [#allocation5], %s100
    %v102 = vld [vmem:[%s101] ss:$8 sm:$0x7]
    %v103 = vpack.c.bf16 %v91, %v91
    %v136 = vunpack.c.l.b16 %v58
    %v137 = vunpack.c.h.b16 %v58
    %v138 = vunpack.c.l.b16 %v59
    %v139 = vunpack.c.l.b16 %v60
    %v140 = vunpack.c.h.b16 %v60
    %v141 = vunpack.c.l.b16 %v61
    %v142 = vunpack.c.l.b16 %v62
    %v143 = vunpack.c.h.b16 %v62
    %v144 = vunpack.c.l.b16 %v63
    %v145 = vunpack.c.l.b16 %v64
    %v146 = vunpack.c.h.b16 %v64
    %v147 = vunpack.c.l.b16 %v65
    %v148 = vunpack.c.l.b16 %v66
    %v149 = vunpack.c.h.b16 %v66
    %v150 = vunpack.c.l.b16 %v67
    %v151 = vunpack.c.l.b16 %v68
    %v152 = vunpack.c.h.b16 %v68
    %v153 = vunpack.c.l.b16 %v69
    %v154 = vunpack.c.l.b16 %v70
    %v155 = vunpack.c.h.b16 %v70
    %v156 = vunpack.c.l.b16 %v71
    %v157 = vunpack.c.l.b16 %v72
    %v158 = vunpack.c.h.b16 %v72
    %v159 = vunpack.c.l.b16 %v73
    %v160 = vunpack.c.l.b16 %v74
    %v161 = vunpack.c.h.b16 %v74
    %v162 = vunpack.c.l.b16 %v75
    %v163 = vunpack.c.l.b16 %v76
    %v164 = vunpack.c.h.b16 %v76
    %v165 = vunpack.c.l.b16 %v77
    %v166 = vunpack.c.l.b16 %v78
    %v167 = vunpack.c.h.b16 %v78
    %v168 = vunpack.c.l.b16 %v79
    %v169 = vunpack.c.l.b16 %v80
    %v170 = vunpack.c.h.b16 %v80
    %v171 = vunpack.c.l.b16 %v81
    %v172 = vunpack.c.l.b16 %v82
    %v173 = vunpack.c.h.b16 %v82
    %v174 = vunpack.c.l.b16 %v83
    %v175 = vunpack.c.l.b16 %v84
    %v176 = vunpack.c.h.b16 %v84
    %v177 = vunpack.c.l.b16 %v85
    %v178 = vunpack.c.l.b16 %v86
    %v179 = vunpack.c.h.b16 %v86
    %v180 = vunpack.c.l.b16 %v87
    %v181 = vunpack.c.l.b16 %v88
    %v182 = vunpack.c.h.b16 %v88
    %v183 = vunpack.c.l.b16 %v89
    %v184 = vpack.c.b16 %v139, %v136
    %v185 = vpack.c.b16 %v140, %v137
    %v186 = vpack.c.b16 %v141, %v138
    %v187 = vpack.c.b16 %v145, %v142
    %v188 = vpack.c.b16 %v146, %v143
    %v189 = vpack.c.b16 %v147, %v144
    %v190 = vpack.c.b16 %v151, %v148
    %v191 = vpack.c.b16 %v152, %v149
    %v192 = vpack.c.b16 %v153, %v150
    %v193 = vpack.c.b16 %v157, %v154
    %v194 = vpack.c.b16 %v158, %v155
    %v195 = vpack.c.b16 %v159, %v156
    %v196 = vpack.c.b16 %v163, %v160
    %v197 = vpack.c.b16 %v164, %v161
    %v198 = vpack.c.b16 %v165, %v162
    %v199 = vpack.c.b16 %v169, %v166
    %v200 = vpack.c.b16 %v170, %v167
    %v201 = vpack.c.b16 %v171, %v168
    %v202 = vpack.c.b16 %v175, %v172
    %v203 = vpack.c.b16 %v176, %v173
    %v204 = vpack.c.b16 %v177, %v174
    %v205 = vpack.c.b16 %v181, %v178
    %v206 = vpack.c.b16 %v182, %v179
    %v207 = vpack.c.b16 %v183, %v180
    %v233 = vlaneseq
    %v234 = vshrl.u32 %v233, 7
    %v235 = vsub.s32 0, %v234
    %v236 = vrot.slane %v90, %v235
    %v237 = vlaneseq
    %v238 = vshrl.u32 %v237, 7
    %v239 = vsub.s32 1, %v238
    %v240 = vrot.slane %v90, %v239
    %v241 = vlaneseq
    %v242 = vshrl.u32 %v241, 7
    %v243 = vsub.s32 2, %v242
    %v244 = vrot.slane %v90, %v243
    %248 = vmatprep.subr.bf16.mxu0 %v206
    %249 = vmatpush1.bf16.msra.mxu0 %v205
    %250 = vmatprep.subr.bf16.mxu0 %v203
    %251 = vmatpush1.bf16.msra.mxu0 %v202
    %252 = vmatprep.subr.bf16.mxu0 %v200
    %253 = vmatpush1.bf16.msra.mxu0 %v199
    %254 = vmatprep.subr.bf16.mxu0 %v197
    %255 = vmatpush1.bf16.msra.mxu0 %v196
    %256 = vmatprep.subr.bf16.mxu0 %v194
    %257 = vmatpush1.bf16.msra.mxu0 %v193
    %258 = vmatprep.subr.bf16.mxu0 %v191
    %259 = vmatpush1.bf16.msra.mxu0 %v190
    %260 = vmatprep.subr.bf16.mxu0 %v188
    %261 = vmatpush1.bf16.msra.mxu0 %v187
    %262 = vmatprep.subr.bf16.mxu0 %v185
    %263 = vmatpush1.bf16.msra.mxu0 %v184
    %264 = vmatprep.subr.bf16.mxu0 0
    %265 = vmatpush2.bf16.msra.mxu0 0
    %266 = vmatprep.subr.bf16.mxu0 0
    %267 = vmatpush2.bf16.msra.mxu0 0
    %268 = vmatprep.subr.bf16.mxu0 0
    %269 = vmatpush2.bf16.msra.mxu0 0
    %270 = vmatprep.subr.bf16.mxu0 0
    %271 = vmatpush2.bf16.msra.mxu0 0
    %272 = vmatprep.subr.bf16.mxu0 0
    %273 = vmatpush2.bf16.msra.mxu0 0
    %274 = vmatprep.subr.bf16.mxu0 0
    %275 = vmatpush2.bf16.msra.mxu0 0
    %276 = vmatprep.subr.bf16.mxu0 0
    %277 = vmatpush2.bf16.msra.mxu0 0
    %278 = vmatprep.subr.bf16.mxu0 0
    %279 = vmatpush2.bf16.msra.mxu0 0
    %280 = vmatprep.mubr.bf16.mxu0 0
    %281 = vmatmul.mubr.bf16.gmra.mxu0 %v103
    %v282 = vpop.f32.mrf.mxu0
    %v283 = vadd.f32 %v236, %v282
    %v284 = vpop.f32.mrf.mxu0
    %v285 = vadd.f32 %v240, %v284
    %v286 = vpop.f32.mrf.mxu0
    %v287 = vpop.f32.mrf.mxu0
    %288 = vdwg.mxu0
    %289 = vmatprep.subr.bf16.mxu0 0
    %290 = vmatpush1.bf16.msra.mxu0 %v207
    %291 = vmatprep.subr.bf16.mxu0 0
    %292 = vmatpush1.bf16.msra.mxu0 %v204
    %293 = vmatprep.subr.bf16.mxu0 0
    %294 = vmatpush1.bf16.msra.mxu0 %v201
    %295 = vmatprep.subr.bf16.mxu0 0
    %296 = vmatpush1.bf16.msra.mxu0 %v198
    %297 = vmatprep.subr.bf16.mxu0 0
    %298 = vmatpush1.bf16.msra.mxu0 %v195
    %299 = vmatprep.subr.bf16.mxu0 0
    %300 = vmatpush1.bf16.msra.mxu0 %v192
    %301 = vmatprep.subr.bf16.mxu0 0
    %302 = vmatpush1.bf16.msra.mxu0 %v189
    %303 = vmatprep.subr.bf16.mxu0 0
    %304 = vmatpush1.bf16.msra.mxu0 %v186
    %305 = vmatprep.subr.bf16.mxu0 0
    %306 = vmatpush2.bf16.msra.mxu0 0
    %307 = vmatprep.subr.bf16.mxu0 0
    %308 = vmatpush2.bf16.msra.mxu0 0
    %309 = vmatprep.subr.bf16.mxu0 0
    %310 = vmatpush2.bf16.msra.mxu0 0
    %311 = vmatprep.subr.bf16.mxu0 0
    %312 = vmatpush2.bf16.msra.mxu0 0
    %313 = vmatprep.subr.bf16.mxu0 0
    %314 = vmatpush2.bf16.msra.mxu0 0
    %315 = vmatprep.subr.bf16.mxu0 0
    %316 = vmatpush2.bf16.msra.mxu0 0
    %317 = vmatprep.subr.bf16.mxu0 0
    %318 = vmatpush2.bf16.msra.mxu0 0
    %319 = vmatprep.subr.bf16.mxu0 0
    %320 = vmatpush2.bf16.msra.mxu0 0
    %321 = vmatprep.mubr.bf16.mxu0 0
    %322 = vmatmul.mubr.bf16.gmra.mxu0 %v103
    %v323 = vpop.f32.mrf.mxu0
    %v324 = vadd.f32 %v244, %v323
    %v325 = vpop.f32.mrf.mxu0
    %v326 = vpop.f32.mrf.mxu0
    %v327 = vpop.f32.mrf.mxu0
    %328 = vdwg.mxu0
    %v329 = vadd.f32 %v102, %v283
    %v330 = vxor.u32 %v329, 2147483648
    %v331 = vmul.f32 %v330, 1.442695
    %v332 = vpow.pop %v331
    %v333 = vadd.f32 %v332, 1.0
    %v334 = vrcp.pop %v333
    %v335 = vmul.f32 1.0, %v334
    %v337 = vrot.slane %v102, 1
    %v339 = vadd.f32 %v337, %v285
    %v340 = vxor.u32 %v339, 2147483648
    %v341 = vmul.f32 %v340, 1.442695
    %v342 = vpow.pop %v341
    %v343 = vadd.f32 %v342, 1.0
    %v344 = vrcp.pop %v343
    %v345 = vmul.f32 1.0, %v344
    %v346 = vmul.f32 %v335, %v324
    %v347 = vrot.slane %v102, 2
    %v349 = vadd.f32 %v347, %v346
    %v350 = vtanh.pop %v349
    %v351 = vsub.f32 1.0, %v345
    %v352 = vmul.f32 %v351, %v350
    %v353 = vmul.f32 %v345, %v91
    %v354 = vadd.f32 %v352, %v353
    %355 = vst [vmem:[#allocation10] sm:$0x1] %v354
    %s356 = sadd.s32 %s92, 1
    %s357 = sld [smem:[#allocation4 + %s356]]
    %s358 = sshra.s32 %s357, 3
    %s359 = sand.u32 %s357, 7
    %s360 = sshra.s32 %s357, 3
    %s361 = sand.u32 %s357, 7
    %s362 = smul.u32 %s358, 3
    %s363 = smul.u32 %s362, 8
    %s364 = sadd.s32 %s363, %s361
    %s365 = scalar_lea.vmem [#allocation5], %s364
    %v366 = vld [vmem:[%s365] ss:$8 sm:$0x7]
    %v367 = vpack.c.bf16 %v354, %v354
    %368 = vmatprep.subr.bf16.mxu0 %v206
    %369 = vmatpush1.bf16.msra.mxu0 %v205
    %370 = vmatprep.subr.bf16.mxu0 %v203
    %371 = vmatpush1.bf16.msra.mxu0 %v202
    %372 = vmatprep.subr.bf16.mxu0 %v200
    %373 = vmatpush1.bf16.msra.mxu0 %v199
    %374 = vmatprep.subr.bf16.mxu0 %v197
    %375 = vmatpush1.bf16.msra.mxu0 %v196
    %376 = vmatprep.subr.bf16.mxu0 %v194
    %377 = vmatpush1.bf16.msra.mxu0 %v193
    %378 = vmatprep.subr.bf16.mxu0 %v191
    %379 = vmatpush1.bf16.msra.mxu0 %v190
    %380 = vmatprep.subr.bf16.mxu0 %v188
    %381 = vmatpush1.bf16.msra.mxu0 %v187
    %382 = vmatprep.subr.bf16.mxu0 %v185
    %383 = vmatpush1.bf16.msra.mxu0 %v184
    %384 = vmatprep.subr.bf16.mxu0 0
    %385 = vmatpush2.bf16.msra.mxu0 0
    %386 = vmatprep.subr.bf16.mxu0 0
    %387 = vmatpush2.bf16.msra.mxu0 0
    %388 = vmatprep.subr.bf16.mxu0 0
    %389 = vmatpush2.bf16.msra.mxu0 0
    %390 = vmatprep.subr.bf16.mxu0 0
    %391 = vmatpush2.bf16.msra.mxu0 0
    %392 = vmatprep.subr.bf16.mxu0 0
    %393 = vmatpush2.bf16.msra.mxu0 0
    %394 = vmatprep.subr.bf16.mxu0 0
    %395 = vmatpush2.bf16.msra.mxu0 0
    %396 = vmatprep.subr.bf16.mxu0 0
    %397 = vmatpush2.bf16.msra.mxu0 0
    %398 = vmatprep.subr.bf16.mxu0 0
    %399 = vmatpush2.bf16.msra.mxu0 0
    %400 = vmatprep.mubr.bf16.mxu0 0
    %401 = vmatmul.mubr.bf16.gmra.mxu0 %v367
    %v402 = vpop.f32.mrf.mxu0
    %v403 = vadd.f32 %v236, %v402
    %v404 = vpop.f32.mrf.mxu0
    %v405 = vadd.f32 %v240, %v404
    %v406 = vpop.f32.mrf.mxu0
    %v407 = vpop.f32.mrf.mxu0
    %408 = vdwg.mxu0
    %409 = vmatprep.subr.bf16.mxu0 0
    %410 = vmatpush1.bf16.msra.mxu0 %v207
    %411 = vmatprep.subr.bf16.mxu0 0
    %412 = vmatpush1.bf16.msra.mxu0 %v204
    %413 = vmatprep.subr.bf16.mxu0 0
    %414 = vmatpush1.bf16.msra.mxu0 %v201
    %415 = vmatprep.subr.bf16.mxu0 0
    %416 = vmatpush1.bf16.msra.mxu0 %v198
    %417 = vmatprep.subr.bf16.mxu0 0
    %418 = vmatpush1.bf16.msra.mxu0 %v195
    %419 = vmatprep.subr.bf16.mxu0 0
    %420 = vmatpush1.bf16.msra.mxu0 %v192
    %421 = vmatprep.subr.bf16.mxu0 0
    %422 = vmatpush1.bf16.msra.mxu0 %v189
    %423 = vmatprep.subr.bf16.mxu0 0
    %424 = vmatpush1.bf16.msra.mxu0 %v186
    %425 = vmatprep.subr.bf16.mxu0 0
    %426 = vmatpush2.bf16.msra.mxu0 0
    %427 = vmatprep.subr.bf16.mxu0 0
    %428 = vmatpush2.bf16.msra.mxu0 0
    %429 = vmatprep.subr.bf16.mxu0 0
    %430 = vmatpush2.bf16.msra.mxu0 0
    %431 = vmatprep.subr.bf16.mxu0 0
    %432 = vmatpush2.bf16.msra.mxu0 0
    %433 = vmatprep.subr.bf16.mxu0 0
    %434 = vmatpush2.bf16.msra.mxu0 0
    %435 = vmatprep.subr.bf16.mxu0 0
    %436 = vmatpush2.bf16.msra.mxu0 0
    %437 = vmatprep.subr.bf16.mxu0 0
    %438 = vmatpush2.bf16.msra.mxu0 0
    %439 = vmatprep.subr.bf16.mxu0 0
    %440 = vmatpush2.bf16.msra.mxu0 0
    %441 = vmatprep.mubr.bf16.mxu0 0
    %442 = vmatmul.mubr.bf16.gmra.mxu0 %v367
    %v443 = vpop.f32.mrf.mxu0
    %v444 = vadd.f32 %v244, %v443
    %v445 = vpop.f32.mrf.mxu0
    %v446 = vpop.f32.mrf.mxu0
    %v447 = vpop.f32.mrf.mxu0
    %448 = vdwg.mxu0
    %v449 = vadd.f32 %v366, %v403
    %v450 = vxor.u32 %v449, 2147483648
    %v451 = vmul.f32 %v450, 1.442695
    %v452 = vpow.pop %v451
    %v453 = vadd.f32 %v452, 1.0
    %v454 = vrcp.pop %v453
    %v455 = vmul.f32 1.0, %v454
    %v457 = vrot.slane %v366, 1
    %v459 = vadd.f32 %v457, %v405
    %v460 = vxor.u32 %v459, 2147483648
    %v461 = vmul.f32 %v460, 1.442695
    %v462 = vpow.pop %v461
    %v463 = vadd.f32 %v462, 1.0
    %v464 = vrcp.pop %v463
    %v465 = vmul.f32 1.0, %v464
    %v466 = vmul.f32 %v455, %v444
    %v467 = vrot.slane %v366, 2
    %v469 = vadd.f32 %v467, %v466
    %v470 = vtanh.pop %v469
    %v471 = vsub.f32 1.0, %v465
    %v472 = vmul.f32 %v471, %v470
    %v473 = vmul.f32 %v465, %v354
    %v474 = vadd.f32 %v472, %v473
    %475 = vst [vmem:[#allocation10 + $0x1] sm:$0x1] %v474
    %s476 = sadd.s32 %s92, 2
    %s477 = sld [smem:[#allocation4 + %s476]]
    %s478 = sshra.s32 %s477, 3
    %s479 = sand.u32 %s477, 7
    %s480 = sshra.s32 %s477, 3
    %s481 = sand.u32 %s477, 7
    %s482 = smul.u32 %s478, 3
    %s483 = smul.u32 %s482, 8
    %s484 = sadd.s32 %s483, %s481
    %s485 = scalar_lea.vmem [#allocation5], %s484
    %v486 = vld [vmem:[%s485] ss:$8 sm:$0x7]
    %v487 = vpack.c.bf16 %v474, %v474
    %488 = vmatprep.subr.bf16.mxu0 %v206
    %489 = vmatpush1.bf16.msra.mxu0 %v205
    %490 = vmatprep.subr.bf16.mxu0 %v203
    %491 = vmatpush1.bf16.msra.mxu0 %v202
    %492 = vmatprep.subr.bf16.mxu0 %v200
    %493 = vmatpush1.bf16.msra.mxu0 %v199
    %494 = vmatprep.subr.bf16.mxu0 %v197
    %495 = vmatpush1.bf16.msra.mxu0 %v196
    %496 = vmatprep.subr.bf16.mxu0 %v194
    %497 = vmatpush1.bf16.msra.mxu0 %v193
    %498 = vmatprep.subr.bf16.mxu0 %v191
    %499 = vmatpush1.bf16.msra.mxu0 %v190
    %500 = vmatprep.subr.bf16.mxu0 %v188
    %501 = vmatpush1.bf16.msra.mxu0 %v187
    %502 = vmatprep.subr.bf16.mxu0 %v185
    %503 = vmatpush1.bf16.msra.mxu0 %v184
    %504 = vmatprep.subr.bf16.mxu0 0
    %505 = vmatpush2.bf16.msra.mxu0 0
    %506 = vmatprep.subr.bf16.mxu0 0
    %507 = vmatpush2.bf16.msra.mxu0 0
    %508 = vmatprep.subr.bf16.mxu0 0
    %509 = vmatpush2.bf16.msra.mxu0 0
    %510 = vmatprep.subr.bf16.mxu0 0
    %511 = vmatpush2.bf16.msra.mxu0 0
    %512 = vmatprep.subr.bf16.mxu0 0
    %513 = vmatpush2.bf16.msra.mxu0 0
    %514 = vmatprep.subr.bf16.mxu0 0
    %515 = vmatpush2.bf16.msra.mxu0 0
    %516 = vmatprep.subr.bf16.mxu0 0
    %517 = vmatpush2.bf16.msra.mxu0 0
    %518 = vmatprep.subr.bf16.mxu0 0
    %519 = vmatpush2.bf16.msra.mxu0 0
    %520 = vmatprep.mubr.bf16.mxu0 0
    %521 = vmatmul.mubr.bf16.gmra.mxu0 %v487
    %v522 = vpop.f32.mrf.mxu0
    %v523 = vadd.f32 %v236, %v522
    %v524 = vpop.f32.mrf.mxu0
    %v525 = vadd.f32 %v240, %v524
    %v526 = vpop.f32.mrf.mxu0
    %v527 = vpop.f32.mrf.mxu0
    %528 = vdwg.mxu0
    %529 = vmatprep.subr.bf16.mxu0 0
    %530 = vmatpush1.bf16.msra.mxu0 %v207
    %531 = vmatprep.subr.bf16.mxu0 0
    %532 = vmatpush1.bf16.msra.mxu0 %v204
    %533 = vmatprep.subr.bf16.mxu0 0
    %534 = vmatpush1.bf16.msra.mxu0 %v201
    %535 = vmatprep.subr.bf16.mxu0 0
    %536 = vmatpush1.bf16.msra.mxu0 %v198
    %537 = vmatprep.subr.bf16.mxu0 0
    %538 = vmatpush1.bf16.msra.mxu0 %v195
    %539 = vmatprep.subr.bf16.mxu0 0
    %540 = vmatpush1.bf16.msra.mxu0 %v192
    %541 = vmatprep.subr.bf16.mxu0 0
    %542 = vmatpush1.bf16.msra.mxu0 %v189
    %543 = vmatprep.subr.bf16.mxu0 0
    %544 = vmatpush1.bf16.msra.mxu0 %v186
    %545 = vmatprep.subr.bf16.mxu0 0
    %546 = vmatpush2.bf16.msra.mxu0 0
    %547 = vmatprep.subr.bf16.mxu0 0
    %548 = vmatpush2.bf16.msra.mxu0 0
    %549 = vmatprep.subr.bf16.mxu0 0
    %550 = vmatpush2.bf16.msra.mxu0 0
    %551 = vmatprep.subr.bf16.mxu0 0
    %552 = vmatpush2.bf16.msra.mxu0 0
    %553 = vmatprep.subr.bf16.mxu0 0
    %554 = vmatpush2.bf16.msra.mxu0 0
    %555 = vmatprep.subr.bf16.mxu0 0
    %556 = vmatpush2.bf16.msra.mxu0 0
    %557 = vmatprep.subr.bf16.mxu0 0
    %558 = vmatpush2.bf16.msra.mxu0 0
    %559 = vmatprep.subr.bf16.mxu0 0
    %560 = vmatpush2.bf16.msra.mxu0 0
    %561 = vmatprep.mubr.bf16.mxu0 0
    %562 = vmatmul.mubr.bf16.gmra.mxu0 %v487
    %v563 = vpop.f32.mrf.mxu0
    %v564 = vadd.f32 %v244, %v563
    %v565 = vpop.f32.mrf.mxu0
    %v566 = vpop.f32.mrf.mxu0
    %v567 = vpop.f32.mrf.mxu0
    %568 = vdwg.mxu0
    %v569 = vadd.f32 %v486, %v523
    %v570 = vxor.u32 %v569, 2147483648
    %v571 = vmul.f32 %v570, 1.442695
    %v572 = vpow.pop %v571
    %v573 = vadd.f32 %v572, 1.0
    %v574 = vrcp.pop %v573
    %v575 = vmul.f32 1.0, %v574
    %v577 = vrot.slane %v486, 1
    %v579 = vadd.f32 %v577, %v525
    %v580 = vxor.u32 %v579, 2147483648
    %v581 = vmul.f32 %v580, 1.442695
    %v582 = vpow.pop %v581
    %v583 = vadd.f32 %v582, 1.0
    %v584 = vrcp.pop %v583
    %v585 = vmul.f32 1.0, %v584
    %v586 = vmul.f32 %v575, %v564
    %v587 = vrot.slane %v486, 2
    %v589 = vadd.f32 %v587, %v586
    %v590 = vtanh.pop %v589
    %v591 = vsub.f32 1.0, %v585
    %v592 = vmul.f32 %v591, %v590
    %v593 = vmul.f32 %v585, %v474
    %v594 = vadd.f32 %v592, %v593
    %595 = vst [vmem:[#allocation10 + $0x2] sm:$0x1] %v594
    %s596 = sadd.s32 %s92, 3
    %s597 = sld [smem:[#allocation4 + %s596]]
    %s598 = sshra.s32 %s597, 3
    %s599 = sand.u32 %s597, 7
    %s600 = sshra.s32 %s597, 3
    %s601 = sand.u32 %s597, 7
    %s602 = smul.u32 %s598, 3
    %s603 = smul.u32 %s602, 8
    %s604 = sadd.s32 %s603, %s601
    %s605 = scalar_lea.vmem [#allocation5], %s604
    %v606 = vld [vmem:[%s605] ss:$8 sm:$0x7]
    %v607 = vpack.c.bf16 %v594, %v594
    %608 = vmatprep.subr.bf16.mxu0 %v206
    %609 = vmatpush1.bf16.msra.mxu0 %v205
    %610 = vmatprep.subr.bf16.mxu0 %v203
    %611 = vmatpush1.bf16.msra.mxu0 %v202
    %612 = vmatprep.subr.bf16.mxu0 %v200
    %613 = vmatpush1.bf16.msra.mxu0 %v199
    %614 = vmatprep.subr.bf16.mxu0 %v197
    %615 = vmatpush1.bf16.msra.mxu0 %v196
    %616 = vmatprep.subr.bf16.mxu0 %v194
    %617 = vmatpush1.bf16.msra.mxu0 %v193
    %618 = vmatprep.subr.bf16.mxu0 %v191
    %619 = vmatpush1.bf16.msra.mxu0 %v190
    %620 = vmatprep.subr.bf16.mxu0 %v188
    %621 = vmatpush1.bf16.msra.mxu0 %v187
    %622 = vmatprep.subr.bf16.mxu0 %v185
    %623 = vmatpush1.bf16.msra.mxu0 %v184
    %624 = vmatprep.subr.bf16.mxu0 0
    %625 = vmatpush2.bf16.msra.mxu0 0
    %626 = vmatprep.subr.bf16.mxu0 0
    %627 = vmatpush2.bf16.msra.mxu0 0
    %628 = vmatprep.subr.bf16.mxu0 0
    %629 = vmatpush2.bf16.msra.mxu0 0
    %630 = vmatprep.subr.bf16.mxu0 0
    %631 = vmatpush2.bf16.msra.mxu0 0
    %632 = vmatprep.subr.bf16.mxu0 0
    %633 = vmatpush2.bf16.msra.mxu0 0
    %634 = vmatprep.subr.bf16.mxu0 0
    %635 = vmatpush2.bf16.msra.mxu0 0
    %636 = vmatprep.subr.bf16.mxu0 0
    %637 = vmatpush2.bf16.msra.mxu0 0
    %638 = vmatprep.subr.bf16.mxu0 0
    %639 = vmatpush2.bf16.msra.mxu0 0
    %640 = vmatprep.mubr.bf16.mxu0 0
    %641 = vmatmul.mubr.bf16.gmra.mxu0 %v607
    %v642 = vpop.f32.mrf.mxu0
    %v643 = vadd.f32 %v236, %v642
    %v644 = vpop.f32.mrf.mxu0
    %v645 = vadd.f32 %v240, %v644
    %v646 = vpop.f32.mrf.mxu0
    %v647 = vpop.f32.mrf.mxu0
    %648 = vdwg.mxu0
    %649 = vmatprep.subr.bf16.mxu0 0
    %650 = vmatpush1.bf16.msra.mxu0 %v207
    %651 = vmatprep.subr.bf16.mxu0 0
    %652 = vmatpush1.bf16.msra.mxu0 %v204
    %653 = vmatprep.subr.bf16.mxu0 0
    %654 = vmatpush1.bf16.msra.mxu0 %v201
    %655 = vmatprep.subr.bf16.mxu0 0
    %656 = vmatpush1.bf16.msra.mxu0 %v198
    %657 = vmatprep.subr.bf16.mxu0 0
    %658 = vmatpush1.bf16.msra.mxu0 %v195
    %659 = vmatprep.subr.bf16.mxu0 0
    %660 = vmatpush1.bf16.msra.mxu0 %v192
    %661 = vmatprep.subr.bf16.mxu0 0
    %662 = vmatpush1.bf16.msra.mxu0 %v189
    %663 = vmatprep.subr.bf16.mxu0 0
    %664 = vmatpush1.bf16.msra.mxu0 %v186
    %665 = vmatprep.subr.bf16.mxu0 0
    %666 = vmatpush2.bf16.msra.mxu0 0
    %667 = vmatprep.subr.bf16.mxu0 0
    %668 = vmatpush2.bf16.msra.mxu0 0
    %669 = vmatprep.subr.bf16.mxu0 0
    %670 = vmatpush2.bf16.msra.mxu0 0
    %671 = vmatprep.subr.bf16.mxu0 0
    %672 = vmatpush2.bf16.msra.mxu0 0
    %673 = vmatprep.subr.bf16.mxu0 0
    %674 = vmatpush2.bf16.msra.mxu0 0
    %675 = vmatprep.subr.bf16.mxu0 0
    %676 = vmatpush2.bf16.msra.mxu0 0
    %677 = vmatprep.subr.bf16.mxu0 0
    %678 = vmatpush2.bf16.msra.mxu0 0
    %679 = vmatprep.subr.bf16.mxu0 0
    %680 = vmatpush2.bf16.msra.mxu0 0
    %681 = vmatprep.mubr.bf16.mxu0 0
    %682 = vmatmul.mubr.bf16.gmra.mxu0 %v607
    %v683 = vpop.f32.mrf.mxu0
    %v684 = vadd.f32 %v244, %v683
    %v685 = vpop.f32.mrf.mxu0
    %v686 = vpop.f32.mrf.mxu0
    %v687 = vpop.f32.mrf.mxu0
    %688 = vdwg.mxu0
    %v689 = vadd.f32 %v606, %v643
    %v690 = vxor.u32 %v689, 2147483648
    %v691 = vmul.f32 %v690, 1.442695
    %v692 = vpow.pop %v691
    %v693 = vadd.f32 %v692, 1.0
    %v694 = vrcp.pop %v693
    %v695 = vmul.f32 1.0, %v694
    %v697 = vrot.slane %v606, 1
    %v699 = vadd.f32 %v697, %v645
    %v700 = vxor.u32 %v699, 2147483648
    %v701 = vmul.f32 %v700, 1.442695
    %v702 = vpow.pop %v701
    %v703 = vadd.f32 %v702, 1.0
    %v704 = vrcp.pop %v703
    %v705 = vmul.f32 1.0, %v704
    %v706 = vmul.f32 %v695, %v684
    %v707 = vrot.slane %v606, 2
    %v709 = vadd.f32 %v707, %v706
    %v710 = vtanh.pop %v709
    %v711 = vsub.f32 1.0, %v705
    %v712 = vmul.f32 %v711, %v710
    %v713 = vmul.f32 %v705, %v594
    %v714 = vadd.f32 %v712, %v713
    %715 = vst [vmem:[#allocation10 + $0x3] sm:$0x1] %v714
    %s716 = sadd.s32 %s92, 4
    %s717 = sld [smem:[#allocation4 + %s716]]
    %s718 = sshra.s32 %s717, 3
    %s719 = sand.u32 %s717, 7
    %s720 = sshra.s32 %s717, 3
    %s721 = sand.u32 %s717, 7
    %s722 = smul.u32 %s718, 3
    %s723 = smul.u32 %s722, 8
    %s724 = sadd.s32 %s723, %s721
    %s725 = scalar_lea.vmem [#allocation5], %s724
    %v726 = vld [vmem:[%s725] ss:$8 sm:$0x7]
    %v727 = vpack.c.bf16 %v714, %v714
    %728 = vmatprep.subr.bf16.mxu0 %v206
    %729 = vmatpush1.bf16.msra.mxu0 %v205
    %730 = vmatprep.subr.bf16.mxu0 %v203
    %731 = vmatpush1.bf16.msra.mxu0 %v202
    %732 = vmatprep.subr.bf16.mxu0 %v200
    %733 = vmatpush1.bf16.msra.mxu0 %v199
    %734 = vmatprep.subr.bf16.mxu0 %v197
    %735 = vmatpush1.bf16.msra.mxu0 %v196
    %736 = vmatprep.subr.bf16.mxu0 %v194
    %737 = vmatpush1.bf16.msra.mxu0 %v193
    %738 = vmatprep.subr.bf16.mxu0 %v191
    %739 = vmatpush1.bf16.msra.mxu0 %v190
    %740 = vmatprep.subr.bf16.mxu0 %v188
    %741 = vmatpush1.bf16.msra.mxu0 %v187
    %742 = vmatprep.subr.bf16.mxu0 %v185
    %743 = vmatpush1.bf16.msra.mxu0 %v184
    %744 = vmatprep.subr.bf16.mxu0 0
    %745 = vmatpush2.bf16.msra.mxu0 0
    %746 = vmatprep.subr.bf16.mxu0 0
    %747 = vmatpush2.bf16.msra.mxu0 0
    %748 = vmatprep.subr.bf16.mxu0 0
    %749 = vmatpush2.bf16.msra.mxu0 0
    %750 = vmatprep.subr.bf16.mxu0 0
    %751 = vmatpush2.bf16.msra.mxu0 0
    %752 = vmatprep.subr.bf16.mxu0 0
    %753 = vmatpush2.bf16.msra.mxu0 0
    %754 = vmatprep.subr.bf16.mxu0 0
    %755 = vmatpush2.bf16.msra.mxu0 0
    %756 = vmatprep.subr.bf16.mxu0 0
    %757 = vmatpush2.bf16.msra.mxu0 0
    %758 = vmatprep.subr.bf16.mxu0 0
    %759 = vmatpush2.bf16.msra.mxu0 0
    %760 = vmatprep.mubr.bf16.mxu0 0
    %761 = vmatmul.mubr.bf16.gmra.mxu0 %v727
    %v762 = vpop.f32.mrf.mxu0
    %v763 = vadd.f32 %v236, %v762
    %v764 = vpop.f32.mrf.mxu0
    %v765 = vadd.f32 %v240, %v764
    %v766 = vpop.f32.mrf.mxu0
    %v767 = vpop.f32.mrf.mxu0
    %768 = vdwg.mxu0
    %769 = vmatprep.subr.bf16.mxu0 0
    %770 = vmatpush1.bf16.msra.mxu0 %v207
    %771 = vmatprep.subr.bf16.mxu0 0
    %772 = vmatpush1.bf16.msra.mxu0 %v204
    %773 = vmatprep.subr.bf16.mxu0 0
    %774 = vmatpush1.bf16.msra.mxu0 %v201
    %775 = vmatprep.subr.bf16.mxu0 0
    %776 = vmatpush1.bf16.msra.mxu0 %v198
    %777 = vmatprep.subr.bf16.mxu0 0
    %778 = vmatpush1.bf16.msra.mxu0 %v195
    %779 = vmatprep.subr.bf16.mxu0 0
    %780 = vmatpush1.bf16.msra.mxu0 %v192
    %781 = vmatprep.subr.bf16.mxu0 0
    %782 = vmatpush1.bf16.msra.mxu0 %v189
    %783 = vmatprep.subr.bf16.mxu0 0
    %784 = vmatpush1.bf16.msra.mxu0 %v186
    %785 = vmatprep.subr.bf16.mxu0 0
    %786 = vmatpush2.bf16.msra.mxu0 0
    %787 = vmatprep.subr.bf16.mxu0 0
    %788 = vmatpush2.bf16.msra.mxu0 0
    %789 = vmatprep.subr.bf16.mxu0 0
    %790 = vmatpush2.bf16.msra.mxu0 0
    %791 = vmatprep.subr.bf16.mxu0 0
    %792 = vmatpush2.bf16.msra.mxu0 0
    %793 = vmatprep.subr.bf16.mxu0 0
    %794 = vmatpush2.bf16.msra.mxu0 0
    %795 = vmatprep.subr.bf16.mxu0 0
    %796 = vmatpush2.bf16.msra.mxu0 0
    %797 = vmatprep.subr.bf16.mxu0 0
    %798 = vmatpush2.bf16.msra.mxu0 0
    %799 = vmatprep.subr.bf16.mxu0 0
    %800 = vmatpush2.bf16.msra.mxu0 0
    %801 = vmatprep.mubr.bf16.mxu0 0
    %802 = vmatmul.mubr.bf16.gmra.mxu0 %v727
    %v803 = vpop.f32.mrf.mxu0
    %v804 = vadd.f32 %v244, %v803
    %v805 = vpop.f32.mrf.mxu0
    %v806 = vpop.f32.mrf.mxu0
    %v807 = vpop.f32.mrf.mxu0
    %808 = vdwg.mxu0
    %v809 = vadd.f32 %v726, %v763
    %v810 = vxor.u32 %v809, 2147483648
    %v811 = vmul.f32 %v810, 1.442695
    %v812 = vpow.pop %v811
    %v813 = vadd.f32 %v812, 1.0
    %v814 = vrcp.pop %v813
    %v815 = vmul.f32 1.0, %v814
    %v817 = vrot.slane %v726, 1
    %v819 = vadd.f32 %v817, %v765
    %v820 = vxor.u32 %v819, 2147483648
    %v821 = vmul.f32 %v820, 1.442695
    %v822 = vpow.pop %v821
    %v823 = vadd.f32 %v822, 1.0
    %v824 = vrcp.pop %v823
    %v825 = vmul.f32 1.0, %v824
    %v826 = vmul.f32 %v815, %v804
    %v827 = vrot.slane %v726, 2
    %v829 = vadd.f32 %v827, %v826
    %v830 = vtanh.pop %v829
    %v831 = vsub.f32 1.0, %v825
    %v832 = vmul.f32 %v831, %v830
    %v833 = vmul.f32 %v825, %v714
    %v834 = vadd.f32 %v832, %v833
    %835 = vst [vmem:[#allocation10 + $0x4] sm:$0x1] %v834
    %s836 = sadd.s32 %s92, 5
    %s837 = sld [smem:[#allocation4 + %s836]]
    %s838 = sshra.s32 %s837, 3
    %s839 = sand.u32 %s837, 7
    %s840 = sshra.s32 %s837, 3
    %s841 = sand.u32 %s837, 7
    %s842 = smul.u32 %s838, 3
    %s843 = smul.u32 %s842, 8
    %s844 = sadd.s32 %s843, %s841
    %s845 = scalar_lea.vmem [#allocation5], %s844
    %v846 = vld [vmem:[%s845] ss:$8 sm:$0x7]
    %v847 = vpack.c.bf16 %v834, %v834
    %848 = vmatprep.subr.bf16.mxu0 %v206
    %849 = vmatpush1.bf16.msra.mxu0 %v205
    %850 = vmatprep.subr.bf16.mxu0 %v203
    %851 = vmatpush1.bf16.msra.mxu0 %v202
    %852 = vmatprep.subr.bf16.mxu0 %v200
    %853 = vmatpush1.bf16.msra.mxu0 %v199
    %854 = vmatprep.subr.bf16.mxu0 %v197
    %855 = vmatpush1.bf16.msra.mxu0 %v196
    %856 = vmatprep.subr.bf16.mxu0 %v194
    %857 = vmatpush1.bf16.msra.mxu0 %v193
    %858 = vmatprep.subr.bf16.mxu0 %v191
    %859 = vmatpush1.bf16.msra.mxu0 %v190
    %860 = vmatprep.subr.bf16.mxu0 %v188
    %861 = vmatpush1.bf16.msra.mxu0 %v187
    %862 = vmatprep.subr.bf16.mxu0 %v185
    %863 = vmatpush1.bf16.msra.mxu0 %v184
    %864 = vmatprep.subr.bf16.mxu0 0
    %865 = vmatpush2.bf16.msra.mxu0 0
    %866 = vmatprep.subr.bf16.mxu0 0
    %867 = vmatpush2.bf16.msra.mxu0 0
    %868 = vmatprep.subr.bf16.mxu0 0
    %869 = vmatpush2.bf16.msra.mxu0 0
    %870 = vmatprep.subr.bf16.mxu0 0
    %871 = vmatpush2.bf16.msra.mxu0 0
    %872 = vmatprep.subr.bf16.mxu0 0
    %873 = vmatpush2.bf16.msra.mxu0 0
    %874 = vmatprep.subr.bf16.mxu0 0
    %875 = vmatpush2.bf16.msra.mxu0 0
    %876 = vmatprep.subr.bf16.mxu0 0
    %877 = vmatpush2.bf16.msra.mxu0 0
    %878 = vmatprep.subr.bf16.mxu0 0
    %879 = vmatpush2.bf16.msra.mxu0 0
    %880 = vmatprep.mubr.bf16.mxu0 0
    %881 = vmatmul.mubr.bf16.gmra.mxu0 %v847
    %v882 = vpop.f32.mrf.mxu0
    %v883 = vadd.f32 %v236, %v882
    %v884 = vpop.f32.mrf.mxu0
    %v885 = vadd.f32 %v240, %v884
    %v886 = vpop.f32.mrf.mxu0
    %v887 = vpop.f32.mrf.mxu0
    %888 = vdwg.mxu0
    %889 = vmatprep.subr.bf16.mxu0 0
    %890 = vmatpush1.bf16.msra.mxu0 %v207
    %891 = vmatprep.subr.bf16.mxu0 0
    %892 = vmatpush1.bf16.msra.mxu0 %v204
    %893 = vmatprep.subr.bf16.mxu0 0
    %894 = vmatpush1.bf16.msra.mxu0 %v201
    %895 = vmatprep.subr.bf16.mxu0 0
    %896 = vmatpush1.bf16.msra.mxu0 %v198
    %897 = vmatprep.subr.bf16.mxu0 0
    %898 = vmatpush1.bf16.msra.mxu0 %v195
    %899 = vmatprep.subr.bf16.mxu0 0
    %900 = vmatpush1.bf16.msra.mxu0 %v192
    %901 = vmatprep.subr.bf16.mxu0 0
    %902 = vmatpush1.bf16.msra.mxu0 %v189
    %903 = vmatprep.subr.bf16.mxu0 0
    %904 = vmatpush1.bf16.msra.mxu0 %v186
    %905 = vmatprep.subr.bf16.mxu0 0
    %906 = vmatpush2.bf16.msra.mxu0 0
    %907 = vmatprep.subr.bf16.mxu0 0
    %908 = vmatpush2.bf16.msra.mxu0 0
    %909 = vmatprep.subr.bf16.mxu0 0
    %910 = vmatpush2.bf16.msra.mxu0 0
    %911 = vmatprep.subr.bf16.mxu0 0
    %912 = vmatpush2.bf16.msra.mxu0 0
    %913 = vmatprep.subr.bf16.mxu0 0
    %914 = vmatpush2.bf16.msra.mxu0 0
    %915 = vmatprep.subr.bf16.mxu0 0
    %916 = vmatpush2.bf16.msra.mxu0 0
    %917 = vmatprep.subr.bf16.mxu0 0
    %918 = vmatpush2.bf16.msra.mxu0 0
    %919 = vmatprep.subr.bf16.mxu0 0
    %920 = vmatpush2.bf16.msra.mxu0 0
    %921 = vmatprep.mubr.bf16.mxu0 0
    %922 = vmatmul.mubr.bf16.gmra.mxu0 %v847
    %v923 = vpop.f32.mrf.mxu0
    %v924 = vadd.f32 %v244, %v923
    %v925 = vpop.f32.mrf.mxu0
    %v926 = vpop.f32.mrf.mxu0
    %v927 = vpop.f32.mrf.mxu0
    %928 = vdwg.mxu0
    %v929 = vadd.f32 %v846, %v883
    %v930 = vxor.u32 %v929, 2147483648
    %v931 = vmul.f32 %v930, 1.442695
    %v932 = vpow.pop %v931
    %v933 = vadd.f32 %v932, 1.0
    %v934 = vrcp.pop %v933
    %v935 = vmul.f32 1.0, %v934
    %v937 = vrot.slane %v846, 1
    %v939 = vadd.f32 %v937, %v885
    %v940 = vxor.u32 %v939, 2147483648
    %v941 = vmul.f32 %v940, 1.442695
    %v942 = vpow.pop %v941
    %v943 = vadd.f32 %v942, 1.0
    %v944 = vrcp.pop %v943
    %v945 = vmul.f32 1.0, %v944
    %v946 = vmul.f32 %v935, %v924
    %v947 = vrot.slane %v846, 2
    %v949 = vadd.f32 %v947, %v946
    %v950 = vtanh.pop %v949
    %v951 = vsub.f32 1.0, %v945
    %v952 = vmul.f32 %v951, %v950
    %v953 = vmul.f32 %v945, %v834
    %v954 = vadd.f32 %v952, %v953
    %955 = vst [vmem:[#allocation10 + $0x5] sm:$0x1] %v954
    %s956 = sadd.s32 %s92, 6
    %s957 = sld [smem:[#allocation4 + %s956]]
    %s958 = sshra.s32 %s957, 3
    %s959 = sand.u32 %s957, 7
    %s960 = sshra.s32 %s957, 3
    %s961 = sand.u32 %s957, 7
    %s962 = smul.u32 %s958, 3
    %s963 = smul.u32 %s962, 8
    %s964 = sadd.s32 %s963, %s961
    %s965 = scalar_lea.vmem [#allocation5], %s964
    %v966 = vld [vmem:[%s965] ss:$8 sm:$0x7]
    %v967 = vpack.c.bf16 %v954, %v954
    %968 = vmatprep.subr.bf16.mxu0 %v206
    %969 = vmatpush1.bf16.msra.mxu0 %v205
    %970 = vmatprep.subr.bf16.mxu0 %v203
    %971 = vmatpush1.bf16.msra.mxu0 %v202
    %972 = vmatprep.subr.bf16.mxu0 %v200
    %973 = vmatpush1.bf16.msra.mxu0 %v199
    %974 = vmatprep.subr.bf16.mxu0 %v197
    %975 = vmatpush1.bf16.msra.mxu0 %v196
    %976 = vmatprep.subr.bf16.mxu0 %v194
    %977 = vmatpush1.bf16.msra.mxu0 %v193
    %978 = vmatprep.subr.bf16.mxu0 %v191
    %979 = vmatpush1.bf16.msra.mxu0 %v190
    %980 = vmatprep.subr.bf16.mxu0 %v188
    %981 = vmatpush1.bf16.msra.mxu0 %v187
    %982 = vmatprep.subr.bf16.mxu0 %v185
    %983 = vmatpush1.bf16.msra.mxu0 %v184
    %984 = vmatprep.subr.bf16.mxu0 0
    %985 = vmatpush2.bf16.msra.mxu0 0
    %986 = vmatprep.subr.bf16.mxu0 0
    %987 = vmatpush2.bf16.msra.mxu0 0
    %988 = vmatprep.subr.bf16.mxu0 0
    %989 = vmatpush2.bf16.msra.mxu0 0
    %990 = vmatprep.subr.bf16.mxu0 0
    %991 = vmatpush2.bf16.msra.mxu0 0
    %992 = vmatprep.subr.bf16.mxu0 0
    %993 = vmatpush2.bf16.msra.mxu0 0
    %994 = vmatprep.subr.bf16.mxu0 0
    %995 = vmatpush2.bf16.msra.mxu0 0
    %996 = vmatprep.subr.bf16.mxu0 0
    %997 = vmatpush2.bf16.msra.mxu0 0
    %998 = vmatprep.subr.bf16.mxu0 0
    %999 = vmatpush2.bf16.msra.mxu0 0
    %1000 = vmatprep.mubr.bf16.mxu0 0
    %1001 = vmatmul.mubr.bf16.gmra.mxu0 %v967
    %v1002 = vpop.f32.mrf.mxu0
    %v1003 = vadd.f32 %v236, %v1002
    %v1004 = vpop.f32.mrf.mxu0
    %v1005 = vadd.f32 %v240, %v1004
    %v1006 = vpop.f32.mrf.mxu0
    %v1007 = vpop.f32.mrf.mxu0
    %1008 = vdwg.mxu0
    %1009 = vmatprep.subr.bf16.mxu0 0
    %1010 = vmatpush1.bf16.msra.mxu0 %v207
    %1011 = vmatprep.subr.bf16.mxu0 0
    %1012 = vmatpush1.bf16.msra.mxu0 %v204
    %1013 = vmatprep.subr.bf16.mxu0 0
    %1014 = vmatpush1.bf16.msra.mxu0 %v201
    %1015 = vmatprep.subr.bf16.mxu0 0
    %1016 = vmatpush1.bf16.msra.mxu0 %v198
    %1017 = vmatprep.subr.bf16.mxu0 0
    %1018 = vmatpush1.bf16.msra.mxu0 %v195
    %1019 = vmatprep.subr.bf16.mxu0 0
    %1020 = vmatpush1.bf16.msra.mxu0 %v192
    %1021 = vmatprep.subr.bf16.mxu0 0
    %1022 = vmatpush1.bf16.msra.mxu0 %v189
    %1023 = vmatprep.subr.bf16.mxu0 0
    %1024 = vmatpush1.bf16.msra.mxu0 %v186
    %1025 = vmatprep.subr.bf16.mxu0 0
    %1026 = vmatpush2.bf16.msra.mxu0 0
    %1027 = vmatprep.subr.bf16.mxu0 0
    %1028 = vmatpush2.bf16.msra.mxu0 0
    %1029 = vmatprep.subr.bf16.mxu0 0
    %1030 = vmatpush2.bf16.msra.mxu0 0
    %1031 = vmatprep.subr.bf16.mxu0 0
    %1032 = vmatpush2.bf16.msra.mxu0 0
    %1033 = vmatprep.subr.bf16.mxu0 0
    %1034 = vmatpush2.bf16.msra.mxu0 0
    %1035 = vmatprep.subr.bf16.mxu0 0
    %1036 = vmatpush2.bf16.msra.mxu0 0
    %1037 = vmatprep.subr.bf16.mxu0 0
    %1038 = vmatpush2.bf16.msra.mxu0 0
    %1039 = vmatprep.subr.bf16.mxu0 0
    %1040 = vmatpush2.bf16.msra.mxu0 0
    %1041 = vmatprep.mubr.bf16.mxu0 0
    %1042 = vmatmul.mubr.bf16.gmra.mxu0 %v967
    %v1043 = vpop.f32.mrf.mxu0
    %v1044 = vadd.f32 %v244, %v1043
    %v1045 = vpop.f32.mrf.mxu0
    %v1046 = vpop.f32.mrf.mxu0
    %v1047 = vpop.f32.mrf.mxu0
    %1048 = vdwg.mxu0
    %v1049 = vadd.f32 %v966, %v1003
    %v1050 = vxor.u32 %v1049, 2147483648
    %v1051 = vmul.f32 %v1050, 1.442695
    %v1052 = vpow.pop %v1051
    %v1053 = vadd.f32 %v1052, 1.0
    %v1054 = vrcp.pop %v1053
    %v1055 = vmul.f32 1.0, %v1054
    %v1057 = vrot.slane %v966, 1
    %v1059 = vadd.f32 %v1057, %v1005
    %v1060 = vxor.u32 %v1059, 2147483648
    %v1061 = vmul.f32 %v1060, 1.442695
    %v1062 = vpow.pop %v1061
    %v1063 = vadd.f32 %v1062, 1.0
    %v1064 = vrcp.pop %v1063
    %v1065 = vmul.f32 1.0, %v1064
    %v1066 = vmul.f32 %v1055, %v1044
    %v1067 = vrot.slane %v966, 2
    %v1069 = vadd.f32 %v1067, %v1066
    %v1070 = vtanh.pop %v1069
    %v1071 = vsub.f32 1.0, %v1065
    %v1072 = vmul.f32 %v1071, %v1070
    %v1073 = vmul.f32 %v1065, %v954
    %v1074 = vadd.f32 %v1072, %v1073
    %1075 = vst [vmem:[#allocation10 + $0x6] sm:$0x1] %v1074
    %s1076 = sadd.s32 %s92, 7
    %s1077 = sld [smem:[#allocation4 + %s1076]]
    %s1078 = sshra.s32 %s1077, 3
    %s1079 = sand.u32 %s1077, 7
    %s1080 = sshra.s32 %s1077, 3
    %s1081 = sand.u32 %s1077, 7
    %s1082 = smul.u32 %s1078, 3
    %s1083 = smul.u32 %s1082, 8
    %s1084 = sadd.s32 %s1083, %s1081
    %s1085 = scalar_lea.vmem [#allocation5], %s1084
    %v1086 = vld [vmem:[%s1085] ss:$8 sm:$0x7]
    %v1087 = vpack.c.bf16 %v1074, %v1074
    %1088 = vmatprep.subr.bf16.mxu0 %v206
    %1089 = vmatpush1.bf16.msra.mxu0 %v205
    %1090 = vmatprep.subr.bf16.mxu0 %v203
    %1091 = vmatpush1.bf16.msra.mxu0 %v202
    %1092 = vmatprep.subr.bf16.mxu0 %v200
    %1093 = vmatpush1.bf16.msra.mxu0 %v199
    %1094 = vmatprep.subr.bf16.mxu0 %v197
    %1095 = vmatpush1.bf16.msra.mxu0 %v196
    %1096 = vmatprep.subr.bf16.mxu0 %v194
    %1097 = vmatpush1.bf16.msra.mxu0 %v193
    %1098 = vmatprep.subr.bf16.mxu0 %v191
    %1099 = vmatpush1.bf16.msra.mxu0 %v190
    %1100 = vmatprep.subr.bf16.mxu0 %v188
    %1101 = vmatpush1.bf16.msra.mxu0 %v187
    %1102 = vmatprep.subr.bf16.mxu0 %v185
    %1103 = vmatpush1.bf16.msra.mxu0 %v184
    %1104 = vmatprep.subr.bf16.mxu0 0
    %1105 = vmatpush2.bf16.msra.mxu0 0
    %1106 = vmatprep.subr.bf16.mxu0 0
    %1107 = vmatpush2.bf16.msra.mxu0 0
    %1108 = vmatprep.subr.bf16.mxu0 0
    %1109 = vmatpush2.bf16.msra.mxu0 0
    %1110 = vmatprep.subr.bf16.mxu0 0
    %1111 = vmatpush2.bf16.msra.mxu0 0
    %1112 = vmatprep.subr.bf16.mxu0 0
    %1113 = vmatpush2.bf16.msra.mxu0 0
    %1114 = vmatprep.subr.bf16.mxu0 0
    %1115 = vmatpush2.bf16.msra.mxu0 0
    %1116 = vmatprep.subr.bf16.mxu0 0
    %1117 = vmatpush2.bf16.msra.mxu0 0
    %1118 = vmatprep.subr.bf16.mxu0 0
    %1119 = vmatpush2.bf16.msra.mxu0 0
    %1120 = vmatprep.mubr.bf16.mxu0 0
    %1121 = vmatmul.mubr.bf16.gmra.mxu0 %v1087
    %v1122 = vpop.f32.mrf.mxu0
    %v1123 = vadd.f32 %v236, %v1122
    %v1124 = vpop.f32.mrf.mxu0
    %v1125 = vadd.f32 %v240, %v1124
    %v1126 = vpop.f32.mrf.mxu0
    %v1127 = vpop.f32.mrf.mxu0
    %1128 = vdwg.mxu0
    %1129 = vmatprep.subr.bf16.mxu0 0
    %1130 = vmatpush1.bf16.msra.mxu0 %v207
    %1131 = vmatprep.subr.bf16.mxu0 0
    %1132 = vmatpush1.bf16.msra.mxu0 %v204
    %1133 = vmatprep.subr.bf16.mxu0 0
    %1134 = vmatpush1.bf16.msra.mxu0 %v201
    %1135 = vmatprep.subr.bf16.mxu0 0
    %1136 = vmatpush1.bf16.msra.mxu0 %v198
    %1137 = vmatprep.subr.bf16.mxu0 0
    %1138 = vmatpush1.bf16.msra.mxu0 %v195
    %1139 = vmatprep.subr.bf16.mxu0 0
    %1140 = vmatpush1.bf16.msra.mxu0 %v192
    %1141 = vmatprep.subr.bf16.mxu0 0
    %1142 = vmatpush1.bf16.msra.mxu0 %v189
    %1143 = vmatprep.subr.bf16.mxu0 0
    %1144 = vmatpush1.bf16.msra.mxu0 %v186
    %1145 = vmatprep.subr.bf16.mxu0 0
    %1146 = vmatpush2.bf16.msra.mxu0 0
    %1147 = vmatprep.subr.bf16.mxu0 0
    %1148 = vmatpush2.bf16.msra.mxu0 0
    %1149 = vmatprep.subr.bf16.mxu0 0
    %1150 = vmatpush2.bf16.msra.mxu0 0
    %1151 = vmatprep.subr.bf16.mxu0 0
    %1152 = vmatpush2.bf16.msra.mxu0 0
    %1153 = vmatprep.subr.bf16.mxu0 0
    %1154 = vmatpush2.bf16.msra.mxu0 0
    %1155 = vmatprep.subr.bf16.mxu0 0
    %1156 = vmatpush2.bf16.msra.mxu0 0
    %1157 = vmatprep.subr.bf16.mxu0 0
    %1158 = vmatpush2.bf16.msra.mxu0 0
    %1159 = vmatprep.subr.bf16.mxu0 0
    %1160 = vmatpush2.bf16.msra.mxu0 0
    %1161 = vmatprep.mubr.bf16.mxu0 0
    %1162 = vmatmul.mubr.bf16.gmra.mxu0 %v1087
    %v1163 = vpop.f32.mrf.mxu0
    %v1164 = vadd.f32 %v244, %v1163
    %v1165 = vpop.f32.mrf.mxu0
    %v1166 = vpop.f32.mrf.mxu0
    %v1167 = vpop.f32.mrf.mxu0
    %1168 = vdwg.mxu0
    %v1169 = vadd.f32 %v1086, %v1123
    %v1170 = vxor.u32 %v1169, 2147483648
    %v1171 = vmul.f32 %v1170, 1.442695
    %v1172 = vpow.pop %v1171
    %v1173 = vadd.f32 %v1172, 1.0
    %v1174 = vrcp.pop %v1173
    %v1175 = vmul.f32 1.0, %v1174
    %v1177 = vrot.slane %v1086, 1
    %v1179 = vadd.f32 %v1177, %v1125
    %v1180 = vxor.u32 %v1179, 2147483648
    %v1181 = vmul.f32 %v1180, 1.442695
    %v1182 = vpow.pop %v1181
    %v1183 = vadd.f32 %v1182, 1.0
    %v1184 = vrcp.pop %v1183
    %v1185 = vmul.f32 1.0, %v1184
    %v1186 = vmul.f32 %v1175, %v1164
    %v1187 = vrot.slane %v1086, 2
    %v1189 = vadd.f32 %v1187, %v1186
    %v1190 = vtanh.pop %v1189
    %v1191 = vsub.f32 1.0, %v1185
    %v1192 = vmul.f32 %v1191, %v1190
    %v1193 = vmul.f32 %v1185, %v1074
    %v1194 = vadd.f32 %v1192, %v1193
    %1195 = vst [vmem:[#allocation10 + $0x7] sm:$0x1] %v1194
    %1196 = vst [vmem:[#allocation2] sm:$0x1] %v1194
    // Predicated region
    $region30: #{tpu_custom_call.1} parent=1 // pred_check
      _
    $region31: #{tpu_custom_call.1} parent=1 // pred_check_branch
      %1198 = sbr.rel (0) target = $region33
    $region32: #{tpu_custom_call.1} parent=1 // pred_region
      %s1200 = ssub.s32 128, 128
      %1201 = vsyncadd [#allocation7], %s1200
      %s1203 = sshll.u32 [#allocation10], 4
      %s1204 = int_to_ptr.vmem [resolvable:$true] %s1203
      %1206 = dma.vmem_to_hbm [thread:$0]  %s1204, 128, %s5, [#allocation7]
    $region33: #{tpu_custom_call.1} parent=1 // pred_fallthru
      _
    // Predicated region
    $region34: #{tpu_custom_call.1} parent=1 // pred_check
      _
    $region35: #{tpu_custom_call.1} parent=1 // pred_check_branch
      %1208 = sbr.rel (0) target = $region37
    $region36: #{tpu_custom_call.1} parent=1 // pred_region
      %1209 = dma.done [#allocation7], 128
    $region37: #{tpu_custom_call.1} parent=1 // pred_fallthru
      _
    %1210 = vsyncpa [#allocation6], 1
    %1211 = vsyncpa [#allocation9], 1
    %1212 = vsyncpa [#allocation7], 1

</llo_original>
